<compile_context>
chip_gen: v5e
topology: v5e:2x2
jax: 0.10.0
libtpu: 0.0.40
codegen_flags: <defaults>
</compile_context>

<pallas_src>
import functools

import jax
import jax.numpy as jnp
from jax.experimental import pallas as pl
from jax.experimental.pallas import tpu as pltpu

_BN_EPS = 1e-5


def _round_up(x, m):
    return (x + m - 1) // m * m


def _vmem_capacity_bytes():
    """Physical VMEM of the part (64 MiB conservative fallback, i.e. v7x)."""
    try:
        return int(pltpu.get_tpu_info().vmem_capacity_bytes)
    except Exception:  # noqa: BLE001 - info query is best-effort
        return 64 * 1024 * 1024


def _critic_kernel(state_ref, action_ref, stats_ref, mat_ref, vec_ref, out_ref,
                   *, s_pad, width, act_dim):
    """One batch tile of the full forward pass, everything resident in VMEM.

    stats_ref (f32, s_pad lanes): row 0 = batch mean, row 1 = 1/sqrt(var+eps)
    vec_ref   (f32, width lanes): row 0 = b1' (BN-folded), row 1 = b2,
                                  row 2 = w3 row, row 3 = b3, rows 4.. = w2a rows
    mat_ref   (bf16, width lanes): rows [0,s_pad) = w1' (BN-folded fc1 weight),
                                   rows [s_pad, s_pad+width) = w2s (fc2 hidden part)
    """
    # --- BatchNorm1d (training mode) with precomputed full-batch stats -------
    x = state_ref[...]                                        # (TB, s_pad) f32
    xhat = (x - stats_ref[0:1, :]) * stats_ref[1:2, :]

    # --- fc1 (+ folded BN affine) + ReLU: bf16 MXU dot, f32 accumulation -----
    h1 = jnp.dot(xhat.astype(jnp.bfloat16), mat_ref[0:s_pad, :],
                 preferred_element_type=jnp.float32)          # (TB, W)
    h1 = jnp.maximum(h1 + vec_ref[0:1, :], 0.0)

    # --- fc2 on cat([h1, action]) + ReLU --------------------------------------
    # Hidden part on the MXU; the K=A action part stays on the VPU as A
    # unrolled broadcast-scaled FMAs (A is tiny -> no near-empty MXU pass).
    h2 = jnp.dot(h1.astype(jnp.bfloat16), mat_ref[s_pad:s_pad + width, :],
                 preferred_element_type=jnp.float32)          # (TB, W)
    act = action_ref[...]                                     # (TB, A) f32
    for k in range(act_dim):
        h2 = h2 + act[:, k:k + 1] * vec_ref[4 + k:5 + k, :]
    h2 = jnp.maximum(h2 + vec_ref[1:2, :], 0.0)

    # --- fc3 (out_features = 1): VPU multiply + XLU lane reduce, no MXU ------
    q = jnp.sum(h2 * vec_ref[2:3, :], axis=-1, keepdims=True)  # (TB, 1)
    out_ref[...] = q + vec_ref[3:4, 0:1]                       # (TB, 1) store


def pack_critic_params(params):
    """Fold BN affine into fc1 and pack all parameters into two VMEM slabs."""
    gamma = params["gamma"]            # (1, S)
    beta = params["beta"]              # (1, S)
    w1 = gamma.reshape(-1, 1) * params["w1"]          # (S, F1)  BN scale folded
    b1 = params["b1"] + beta @ params["w1"]           # (1, F1)  BN shift folded
    w2s, w2a, b2 = params["w2s"], params["w2a"], params["b2"]
    w3, b3 = params["w3"], params["b3"]

    S, F1 = w1.shape
    A, F2 = w2a.shape
    W = _round_up(max(F1, F2), 128)        # lane width of the whole pipeline
    S_pad = _round_up(S, 16)               # bf16 sublane packing alignment

    # bf16 matmul slab: [w1' ; w2s], zero-padded (padding is numerically exact).
    mat = jnp.zeros((S_pad + W, W), jnp.float32)
    mat = mat.at[:S, :F1].set(w1)
    mat = mat.at[S_pad:S_pad + F1, :F2].set(w2s)
    mat = mat.astype(jnp.bfloat16)

    # f32 vector slab: biases / fc3 row / fc2-action rows.
    rows = _round_up(4 + A, 8)
    vec = jnp.zeros((rows, W), jnp.float32)
    vec = vec.at[0, :F1].set(b1[0])
    vec = vec.at[1, :F2].set(b2[0])
    vec = vec.at[2, :F2].set(w3[:, 0])
    vec = vec.at[3, :].set(b3[0, 0])
    vec = vec.at[4:4 + A, :F2].set(w2a)

    return {"mat": mat, "vec": vec}


@functools.partial(jax.jit, static_argnames=("block_rows",))
def critic_forward(state, action, packed, *, block_rows=256):
    mat, vec = packed["mat"], packed["vec"]
    B, S = state.shape
    A = action.shape[1]
    W = mat.shape[1]
    s_pad = mat.shape[0] - W

    # Skip wrapper passes when not needed.
    if state.dtype != jnp.float32:
        state = state.astype(jnp.float32)
    if action.dtype != jnp.float32:
        action = action.astype(jnp.float32)
    if S < s_pad:  # zero-padded state columns normalize to exactly 0 under BN
        state = jnp.pad(state, ((0, 0), (0, s_pad - S)))

    # Full-batch BN statistics (tiny XLA reduce over the *real* rows only),
    # one-pass sum / sum-of-squares form.
    mean = jnp.mean(state, axis=0, keepdims=True)                    # (1, s_pad)
    var = jnp.maximum(
        jnp.mean(state * state, axis=0, keepdims=True) - mean * mean, 0.0)
    inv_std = jax.lax.rsqrt(var + _BN_EPS)
    stats = (jnp.zeros((8, s_pad), jnp.float32)
             .at[0:1, :].set(mean)
             .at[1:2, :].set(inv_std))

    # Batch tiling (weights stay VMEM-resident; batch axis is "parallel").
    tb = _round_up(min(block_rows, _round_up(B, 8)), 8)
    grid_b = pl.cdiv(B, tb)
    b_pad = grid_b * tb
    if b_pad != B:
        state = jnp.pad(state, ((0, b_pad - B), (0, 0)))
        action = jnp.pad(action, ((0, b_pad - B), (0, 0)))

    kernel = functools.partial(_critic_kernel, s_pad=s_pad, width=W, act_dim=A)

    # VMEM budget: resident slabs + double-buffered batch tiles + f32/bf16
    # intermediates, capped by the physical VMEM of the part (v7x = 64 MiB).
    weight_bytes = (mat.size * mat.dtype.itemsize
                    + vec.size * vec.dtype.itemsize
                    + stats.size * stats.dtype.itemsize)
    tile_bytes = tb * ((s_pad + A + 1) * 4) + 4 * tb * W * 4
    vmem_limit = int(min(max(weight_bytes + 4 * tile_bytes, 4 * 1024 * 1024),
                         (_vmem_capacity_bytes() * 7) // 8))

    # Advisory cost so XLA can overlap this call with surrounding work.
    flops = 2 * b_pad * (s_pad * W + W * W + A * W + W)
    bytes_accessed = b_pad * (s_pad + A + 1) * 4 + weight_bytes
    cost = pl.CostEstimate(flops=flops, transcendentals=0,
                           bytes_accessed=bytes_accessed)

    out = pl.pallas_call(
        kernel,
        out_shape=jax.ShapeDtypeStruct((b_pad, 1), jnp.float32),
        grid_spec=pltpu.PrefetchScalarGridSpec(
            num_scalar_prefetch=0,
            grid=(grid_b,),
            in_specs=[
                pl.BlockSpec((tb, s_pad), lambda i: (i, 0)),        # state tile
                pl.BlockSpec((tb, A), lambda i: (i, 0)),            # action tile
                pl.BlockSpec((8, s_pad), lambda i: (0, 0)),         # BN stats
                pl.BlockSpec((s_pad + W, W), lambda i: (0, 0)),     # weight slab
                pl.BlockSpec(tuple(vec.shape), lambda i: (0, 0)),   # vector slab
            ],
            out_specs=pl.BlockSpec((tb, 1), lambda i: (i, 0)),
        ),
        compiler_params=pltpu.CompilerParams(
            dimension_semantics=("parallel",),
            vmem_limit_bytes=vmem_limit,
        ),
        cost_estimate=cost,
    )(state, action, stats, mat, vec)

    return out[:B] if b_pad != B else out                     # (B, 1) Q-values


def init_critic_params(key, state_size, action_size,
                       fcs1_units=128, fc2_units=64):
    """Parameter init mirroring the PyTorch module (logical / unpacked form)."""
    ks = jax.random.split(key, 6)

    def uniform(k, shape, lim):
        return jax.random.uniform(k, shape, jnp.float32, minval=-lim, maxval=lim)

    # reset_parameters uses lim = 1/sqrt(weight.size(0)) == 1/sqrt(out_features)
    lim1 = 1.0 / jnp.sqrt(fcs1_units)
    lim2 = 1.0 / jnp.sqrt(fc2_units)
    w1 = uniform(ks[0], (state_size, fcs1_units), lim1)
    b1 = uniform(ks[1], (1, fcs1_units), 1.0 / jnp.sqrt(state_size))
    w2_full = uniform(ks[2], (fcs1_units + action_size, fc2_units), lim2)
    b2 = uniform(ks[3], (1, fc2_units), 1.0 / jnp.sqrt(fcs1_units + action_size))
    w3 = uniform(ks[4], (fc2_units, 1), 0.003)
    b3 = uniform(ks[5], (1, 1), 1.0 / jnp.sqrt(fc2_units))

    return {
        "gamma": jnp.ones((1, state_size), jnp.float32),   # BatchNorm1d weight
        "beta": jnp.zeros((1, state_size), jnp.float32),   # BatchNorm1d bias
        "w1": w1, "b1": b1,
        "w2s": w2_full[:fcs1_units, :],   # fc2 columns acting on hidden state
        "w2a": w2_full[fcs1_units:, :],   # fc2 columns acting on action
        "b2": b2,
        "w3": w3, "b3": b3,
    }


def _reference_forward(state, action, params):
    """Pure-JAX f32 reference (matches the PyTorch module exactly)."""
    x = state.astype(jnp.float32)
    mean = jnp.mean(x, axis=0, keepdims=True)
    var = jnp.mean((x - mean) ** 2, axis=0, keepdims=True)
    xs = (x - mean) / jnp.sqrt(var + _BN_EPS) * params["gamma"] + params["beta"]
    h1 = jnp.maximum(xs @ params["w1"] + params["b1"], 0.0)
    h2 = jnp.maximum(h1 @ params["w2s"] + action @ params["w2a"] + params["b2"], 0.0)
    return h2 @ params["w3"] + params["b3"]


if __name__ == "__main__":
    key = jax.random.PRNGKey(0)
    k_state, k_action, k_params = jax.random.split(key, 3)

    # Small shapes; batch=384 with 256-row tiles exercises the grid (2 steps)
    # and the ragged-batch padding path.
    batch = 384
    state_size = 16
    action_size = 4
    fcs1_units = 128
    fc2_units = 64

    state = jax.random.normal(k_state, (batch, state_size), jnp.float32)
    action = jax.random.normal(k_action, (batch, action_size), jnp.float32)
    params = init_critic_params(k_params, state_size, action_size,
                                fcs1_units=fcs1_units, fc2_units=fc2_units)
    packed = pack_critic_params(params)   # one-time fold + slab packing

    q = critic_forward(state, action, packed, block_rows=256)
    jax.block_until_ready(q)

    q_ref = _reference_forward(state, action, params)
    assert q.shape == (batch, 1)
    # bf16 MXU inputs (f32 accumulation) => small deviation vs the f32 reference.
    max_err = float(jnp.max(jnp.abs(q - q_ref)))
    assert jnp.allclose(q, q_ref, atol=3e-2, rtol=3e-2), max_err

    print("KERNEL_OK")
</pallas_src>

<mosaic_0001>
module attributes {stable_mosaic.version = 11 : i64} {
  func.func @_critic_kernel(%arg0: i32, %arg1: memref<256x16xf32, #tpu.memory_space<vmem>>, %arg2: memref<256x4xf32, #tpu.memory_space<vmem>>, %arg3: memref<8x16xf32, #tpu.memory_space<vmem>>, %arg4: memref<144x128xbf16, #tpu.memory_space<vmem>>, %arg5: memref<8x128xf32, #tpu.memory_space<vmem>>, %arg6: memref<256x1xf32, #tpu.memory_space<vmem>>) attributes {dimension_semantics = [#tpu.dimension_semantics<parallel>], iteration_bounds = array<i64: 2>, scalar_prefetch = 0 : i64, scratch_operands = 0 : i64, tpu.core_type = #tpu.core_type<tc>, window_params = [{transform_indices = @transform_0, window_bounds = array<i64: 256, 16>}, {transform_indices = @transform_1, window_bounds = array<i64: 256, 4>}, {pipeline_mode = #tpu.pipeline_mode<synchronous>, transform_indices = @transform_2, window_bounds = array<i64: 8, 16>}, {pipeline_mode = #tpu.pipeline_mode<synchronous>, transform_indices = @transform_3, window_bounds = array<i64: 144, 128>}, {pipeline_mode = #tpu.pipeline_mode<synchronous>, transform_indices = @transform_4, window_bounds = array<i64: 8, 128>}, {transform_indices = @transform_5, window_bounds = array<i64: 256, 1>}]} {
    %c0 = arith.constant 0 : index
    %c0_0 = arith.constant 0 : index
    %0 = vector.load %arg1[%c0, %c0_0] : memref<256x16xf32, #tpu.memory_space<vmem>>, vector<256x16xf32>
    %c0_1 = arith.constant 0 : index
    %c0_2 = arith.constant 0 : index
    %1 = vector.load %arg3[%c0_1, %c0_2] : memref<8x16xf32, #tpu.memory_space<vmem>>, vector<1x16xf32>
    %2 = vector.broadcast %1 : vector<1x16xf32> to vector<256x16xf32>
    %3 = arith.subf %0, %2 : vector<256x16xf32>
    %c1 = arith.constant 1 : index
    %c0_3 = arith.constant 0 : index
    %4 = vector.load %arg3[%c1, %c0_3] : memref<8x16xf32, #tpu.memory_space<vmem>>, vector<1x16xf32>
    %5 = vector.broadcast %4 : vector<1x16xf32> to vector<256x16xf32>
    %6 = arith.mulf %3, %5 : vector<256x16xf32>
    %7 = arith.truncf %6 : vector<256x16xf32> to vector<256x16xbf16>
    %c0_4 = arith.constant 0 : index
    %c0_5 = arith.constant 0 : index
    %8 = vector.load %arg4[%c0_4, %c0_5] : memref<144x128xbf16, #tpu.memory_space<vmem>>, vector<16x128xbf16>
    %cst = arith.constant dense<0.000000e+00> : vector<256x128xf32>
    %9 = tpu.matmul %7, %8, %cst {dimension_numbers = #tpu.dot_dimension_numbers<[1], [0], [0], [1], [0, 0, 1, 1], [], []>} : vector<256x16xbf16>, vector<16x128xbf16>, vector<256x128xf32> -> vector<256x128xf32>
    %c0_6 = arith.constant 0 : index
    %c0_7 = arith.constant 0 : index
    %10 = vector.load %arg5[%c0_6, %c0_7] : memref<8x128xf32, #tpu.memory_space<vmem>>, vector<1x128xf32>
    %11 = vector.broadcast %10 : vector<1x128xf32> to vector<256x128xf32>
    %12 = arith.addf %9, %11 : vector<256x128xf32>
    %cst_8 = arith.constant 0.000000e+00 : f32
    %13 = vector.broadcast %cst_8 : f32 to vector<256x128xf32>
    %14 = arith.maximumf %12, %13 : vector<256x128xf32>
    %15 = arith.truncf %14 : vector<256x128xf32> to vector<256x128xbf16>
    %c16 = arith.constant 16 : index
    %c0_9 = arith.constant 0 : index
    %16 = vector.load %arg4[%c16, %c0_9] : memref<144x128xbf16, #tpu.memory_space<vmem>>, vector<128x128xbf16>
    %cst_10 = arith.constant dense<0.000000e+00> : vector<256x128xf32>
    %17 = tpu.matmul %15, %16, %cst_10 {dimension_numbers = #tpu.dot_dimension_numbers<[1], [0], [0], [1], [0, 0, 1, 1], [], []>} : vector<256x128xbf16>, vector<128x128xbf16>, vector<256x128xf32> -> vector<256x128xf32>
    %c0_11 = arith.constant 0 : index
    %c0_12 = arith.constant 0 : index
    %18 = vector.load %arg2[%c0_11, %c0_12] : memref<256x4xf32, #tpu.memory_space<vmem>>, vector<256x4xf32>
    %19 = vector.extract_strided_slice %18 {offsets = [0, 0], sizes = [256, 1], strides = [1, 1]} : vector<256x4xf32> to vector<256x1xf32>
    %c4 = arith.constant 4 : index
    %c0_13 = arith.constant 0 : index
    %20 = vector.load %arg5[%c4, %c0_13] : memref<8x128xf32, #tpu.memory_space<vmem>>, vector<1x128xf32>
    %21 = vector.broadcast %19 : vector<256x1xf32> to vector<256x128xf32>
    %22 = vector.broadcast %20 : vector<1x128xf32> to vector<256x128xf32>
    %23 = arith.mulf %21, %22 : vector<256x128xf32>
    %24 = arith.addf %17, %23 : vector<256x128xf32>
    %25 = vector.extract_strided_slice %18 {offsets = [0, 1], sizes = [256, 1], strides = [1, 1]} : vector<256x4xf32> to vector<256x1xf32>
    %c5 = arith.constant 5 : index
    %c0_14 = arith.constant 0 : index
    %26 = vector.load %arg5[%c5, %c0_14] : memref<8x128xf32, #tpu.memory_space<vmem>>, vector<1x128xf32>
    %27 = vector.broadcast %25 : vector<256x1xf32> to vector<256x128xf32>
    %28 = vector.broadcast %26 : vector<1x128xf32> to vector<256x128xf32>
    %29 = arith.mulf %27, %28 : vector<256x128xf32>
    %30 = arith.addf %24, %29 : vector<256x128xf32>
    %31 = vector.extract_strided_slice %18 {offsets = [0, 2], sizes = [256, 1], strides = [1, 1]} : vector<256x4xf32> to vector<256x1xf32>
    %c6 = arith.constant 6 : index
    %c0_15 = arith.constant 0 : index
    %32 = vector.load %arg5[%c6, %c0_15] : memref<8x128xf32, #tpu.memory_space<vmem>>, vector<1x128xf32>
    %33 = vector.broadcast %31 : vector<256x1xf32> to vector<256x128xf32>
    %34 = vector.broadcast %32 : vector<1x128xf32> to vector<256x128xf32>
    %35 = arith.mulf %33, %34 : vector<256x128xf32>
    %36 = arith.addf %30, %35 : vector<256x128xf32>
    %37 = vector.extract_strided_slice %18 {offsets = [0, 3], sizes = [256, 1], strides = [1, 1]} : vector<256x4xf32> to vector<256x1xf32>
    %c7 = arith.constant 7 : index
    %c0_16 = arith.constant 0 : index
    %38 = vector.load %arg5[%c7, %c0_16] : memref<8x128xf32, #tpu.memory_space<vmem>>, vector<1x128xf32>
    %39 = vector.broadcast %37 : vector<256x1xf32> to vector<256x128xf32>
    %40 = vector.broadcast %38 : vector<1x128xf32> to vector<256x128xf32>
    %41 = arith.mulf %39, %40 : vector<256x128xf32>
    %42 = arith.addf %36, %41 : vector<256x128xf32>
    %c1_17 = arith.constant 1 : index
    %c0_18 = arith.constant 0 : index
    %43 = vector.load %arg5[%c1_17, %c0_18] : memref<8x128xf32, #tpu.memory_space<vmem>>, vector<1x128xf32>
    %44 = vector.broadcast %43 : vector<1x128xf32> to vector<256x128xf32>
    %45 = arith.addf %42, %44 : vector<256x128xf32>
    %cst_19 = arith.constant 0.000000e+00 : f32
    %46 = vector.broadcast %cst_19 : f32 to vector<256x128xf32>
    %47 = arith.maximumf %45, %46 : vector<256x128xf32>
    %c2 = arith.constant 2 : index
    %c0_20 = arith.constant 0 : index
    %48 = vector.load %arg5[%c2, %c0_20] : memref<8x128xf32, #tpu.memory_space<vmem>>, vector<1x128xf32>
    %49 = vector.broadcast %48 : vector<1x128xf32> to vector<256x128xf32>
    %50 = arith.mulf %47, %49 : vector<256x128xf32>
    %cst_21 = arith.constant dense<0.000000e+00> : vector<256xf32>
    %51 = vector.multi_reduction <add>, %50, %cst_21 [1] : vector<256x128xf32> to vector<256xf32>
    %52 = vector.shape_cast %51 : vector<256xf32> to vector<256x1xf32>
    %c3 = arith.constant 3 : index
    %c0_22 = arith.constant 0 : index
    %53 = vector.load %arg5[%c3, %c0_22] : memref<8x128xf32, #tpu.memory_space<vmem>>, vector<1x1xf32>
    %54 = vector.broadcast %53 : vector<1x1xf32> to vector<256x1xf32>
    %55 = arith.addf %52, %54 : vector<256x1xf32>
    %c0_23 = arith.constant 0 : index
    %c0_24 = arith.constant 0 : index
    %56 = vector.load %arg6[%c0_23, %c0_24] : memref<256x1xf32, #tpu.memory_space<vmem>>, vector<256x1xf32>
    tpu.vector_store %arg6[%c0_23, %c0_24], %55 {strides = array<i32>} : memref<256x1xf32, #tpu.memory_space<vmem>>, vector<256x1xf32>,
    return
  }
  func.func @transform_0(%arg0: i32) -> (i32, i32) {
    %c0_i32 = arith.constant 0 : i32
    %c0_i32_0 = arith.constant 0 : i32
    return %arg0, %c0_i32 : i32, i32
  }
  func.func @transform_1(%arg0: i32) -> (i32, i32) {
    %c0_i32 = arith.constant 0 : i32
    %c0_i32_0 = arith.constant 0 : i32
    return %arg0, %c0_i32 : i32, i32
  }
  func.func @transform_2(%arg0: i32) -> (i32, i32) {
    %c0_i32 = arith.constant 0 : i32
    %c0_i32_0 = arith.constant 0 : i32
    %c0_i32_1 = arith.constant 0 : i32
    return %c0_i32, %c0_i32_0 : i32, i32
  }
  func.func @transform_3(%arg0: i32) -> (i32, i32) {
    %c0_i32 = arith.constant 0 : i32
    %c0_i32_0 = arith.constant 0 : i32
    %c0_i32_1 = arith.constant 0 : i32
    return %c0_i32, %c0_i32_0 : i32, i32
  }
  func.func @transform_4(%arg0: i32) -> (i32, i32) {
    %c0_i32 = arith.constant 0 : i32
    %c0_i32_0 = arith.constant 0 : i32
    %c0_i32_1 = arith.constant 0 : i32
    return %c0_i32, %c0_i32_0 : i32, i32
  }
  func.func @transform_5(%arg0: i32) -> (i32, i32) {
    %c0_i32 = arith.constant 0 : i32
    %c0_i32_0 = arith.constant 0 : i32
    return %arg0, %c0_i32 : i32, i32
  }
}

</mosaic_0001>

<llo_original>
// kernel: critic_forward.1
$region0: #{critic_forward.1}
  #allocation0 [shape = 'u32[]', space=smem, size = 0x4, offset = 0x4, fixed_abs, tag = 'smem constant byte address 0x4 - core index']
  #allocation1 [shape = 'u32[72,128]{1,0:T(1,128)}', space=vmem, size = 0x9000, scoped, tag = 'internal scratch']
  %s0 = inlined_call_operand.vmem [shape: f32[512,16], index: 0, kind: input, shape index: {}]
  %s1 = inlined_call_operand.vmem [shape: f32[512,4], index: 1, kind: input, shape index: {}]
  %s2 = inlined_call_operand.vmem [shape: f32[8,16], index: 2, kind: input, shape index: {}]
  %s3 = inlined_call_operand.vmem [shape: bf16[144,128], index: 3, kind: input, shape index: {}]
  %s4 = inlined_call_operand.vmem [shape: f32[8,128], index: 4, kind: input, shape index: {}]
  %s5 = inlined_call_operand.vmem [shape: f32[512,1], index: 5, kind: output, shape index: {}]
  %s6 = sld [smem:[#allocation0]]
  $region53: #{critic_forward.1} parent=0
    _
  %s8 = ssub.s32 1, %s6
  %s9 = scalar_select 0, %s8, %s6
  loop: start=0, step=1, limit=4
  $region2: #{critic_forward.1} parent=0 // loop_pre_header
    _
  $region3: #{critic_forward.1} parent=0 // loop_header
    %s11 = sphi 0, %s15
    %p12 = scmp.ge.s32.totalorder %s11, 4
    %s21 = sphi 0, %s23
    %s24 = sphi 0, %s21
    %s25 = sphi 0, %s24
    %s41 = sphi 0, %s25
    %s47 = sphi 0, %s49
    %s50 = sphi 0, %s47
    %s51 = sphi 0, %s50
    %s67 = sphi 0, %s51
    %s71 = sphi 0, %s71
    %s73 = sphi 0, %s71
    %s74 = sphi 0, %s73
    %s88 = sphi 0, %s74
    %s92 = sphi 0, %s92
    %s94 = sphi 0, %s92
    %s95 = sphi 0, %s94
    %s109 = sphi 0, %s95
    %s113 = sphi 0, %s113
    %s115 = sphi 0, %s113
    %s116 = sphi 0, %s115
    %s130 = sphi 0, %s116
    %s136 = sphi 0, %s138
    %s139 = sphi 0, %s136
    %s140 = sphi 0, %s139
    %s156 = sphi 0, %s140
  $region4: #{critic_forward.1} parent=0 // loop_header_branch
    %14 = sbr.rel (%p12) target = $region8
  $region5: #{critic_forward.1} parent=0 // loop_body
    %s16 = ssub.s32 %s11, 1
    %s17 = ssub.s32 %s11, 2
    %s18 = sadd.s32 %s11, 1
    %s19 = ssub.s32 %s11, %s18
    %p20 = scmp.eq.s32.totalorder %s19, 0
    %s22 = sadd.s32 %s21, 1
    %s23 = scalar_select %p20, %s21, %s22
    %p26 = pneg %p20
    %p27 = scmp.eq.s32.totalorder %s11, 1
    %p28 = por %p26, %p27
    %p29 = scmp.ne.s32.totalorder %s21, %s24
    %p30 = scmp.eq.s32.totalorder %s11, 0
    %p31 = por %p29, %p30
    %p32 = scmp.ne.s32.totalorder %s21, %s24
    %p33 = scmp.eq.s32.totalorder %s16, 1
    %p34 = por %p32, %p33
    %p35 = scmp.ne.s32.totalorder %s24, %s25
    %p36 = scmp.eq.s32.totalorder %s16, 0
    %p37 = por %p35, %p36
    %p38 = scmp.ne.s32.totalorder %s24, %s25
    %p39 = scmp.eq.s32.totalorder %s17, 1
    %p40 = por %p38, %p39
    %p42 = scmp.ne.s32.totalorder %s25, %s41
    %p43 = scmp.eq.s32.totalorder %s17, 0
    %p44 = por %p42, %p43
    %s45 = ssub.s32 %s11, %s18
    %p46 = scmp.eq.s32.totalorder %s45, 0
    %s48 = sadd.s32 %s47, 1
    %s49 = scalar_select %p46, %s47, %s48
    %p52 = pneg %p46
    %p53 = scmp.eq.s32.totalorder %s11, 1
    %p54 = por %p52, %p53
    %p55 = scmp.ne.s32.totalorder %s47, %s50
    %p56 = scmp.eq.s32.totalorder %s11, 0
    %p57 = por %p55, %p56
    %p58 = scmp.ne.s32.totalorder %s47, %s50
    %p59 = scmp.eq.s32.totalorder %s16, 1
    %p60 = por %p58, %p59
    %p61 = scmp.ne.s32.totalorder %s50, %s51
    %p62 = scmp.eq.s32.totalorder %s16, 0
    %p63 = por %p61, %p62
    %p64 = scmp.ne.s32.totalorder %s50, %s51
    %p65 = scmp.eq.s32.totalorder %s17, 1
    %p66 = por %p64, %p65
    %p68 = scmp.ne.s32.totalorder %s51, %s67
    %p69 = scmp.eq.s32.totalorder %s17, 0
    %p70 = por %p68, %p69
    %s72 = sadd.s32 %s71, 1
    %p75 = scmp.eq.s32.totalorder %s11, 1
    %p76 = scmp.ne.s32.totalorder %s71, %s73
    %p77 = scmp.eq.s32.totalorder %s11, 0
    %p78 = por %p76, %p77
    %p79 = scmp.ne.s32.totalorder %s71, %s73
    %p80 = scmp.eq.s32.totalorder %s16, 1
    %p81 = por %p79, %p80
    %p82 = scmp.ne.s32.totalorder %s73, %s74
    %p83 = scmp.eq.s32.totalorder %s16, 0
    %p84 = por %p82, %p83
    %p85 = scmp.ne.s32.totalorder %s73, %s74
    %p86 = scmp.eq.s32.totalorder %s17, 1
    %p87 = por %p85, %p86
    %p89 = scmp.ne.s32.totalorder %s74, %s88
    %p90 = scmp.eq.s32.totalorder %s17, 0
    %p91 = por %p89, %p90
    %s93 = sadd.s32 %s92, 1
    %p96 = scmp.eq.s32.totalorder %s11, 1
    %p97 = scmp.ne.s32.totalorder %s92, %s94
    %p98 = scmp.eq.s32.totalorder %s11, 0
    %p99 = por %p97, %p98
    %p100 = scmp.ne.s32.totalorder %s92, %s94
    %p101 = scmp.eq.s32.totalorder %s16, 1
    %p102 = por %p100, %p101
    %p103 = scmp.ne.s32.totalorder %s94, %s95
    %p104 = scmp.eq.s32.totalorder %s16, 0
    %p105 = por %p103, %p104
    %p106 = scmp.ne.s32.totalorder %s94, %s95
    %p107 = scmp.eq.s32.totalorder %s17, 1
    %p108 = por %p106, %p107
    %p110 = scmp.ne.s32.totalorder %s95, %s109
    %p111 = scmp.eq.s32.totalorder %s17, 0
    %p112 = por %p110, %p111
    %s114 = sadd.s32 %s113, 1
    %p117 = scmp.eq.s32.totalorder %s11, 1
    %p118 = scmp.ne.s32.totalorder %s113, %s115
    %p119 = scmp.eq.s32.totalorder %s11, 0
    %p120 = por %p118, %p119
    %p121 = scmp.ne.s32.totalorder %s113, %s115
    %p122 = scmp.eq.s32.totalorder %s16, 1
    %p123 = por %p121, %p122
    %p124 = scmp.ne.s32.totalorder %s115, %s116
    %p125 = scmp.eq.s32.totalorder %s16, 0
    %p126 = por %p124, %p125
    %p127 = scmp.ne.s32.totalorder %s115, %s116
    %p128 = scmp.eq.s32.totalorder %s17, 1
    %p129 = por %p127, %p128
    %p131 = scmp.ne.s32.totalorder %s116, %s130
    %p132 = scmp.eq.s32.totalorder %s17, 0
    %p133 = por %p131, %p132
    %s134 = ssub.s32 %s11, %s18
    %p135 = scmp.eq.s32.totalorder %s134, 0
    %s137 = sadd.s32 %s136, 1
    %s138 = scalar_select %p135, %s136, %s137
    %p141 = pneg %p135
    %p142 = scmp.eq.s32.totalorder %s11, 1
    %p143 = por %p141, %p142
    %p144 = scmp.ne.s32.totalorder %s136, %s139
    %p145 = scmp.eq.s32.totalorder %s11, 0
    %p146 = por %p144, %p145
    %p147 = scmp.ne.s32.totalorder %s136, %s139
    %p148 = scmp.eq.s32.totalorder %s16, 1
    %p149 = por %p147, %p148
    %p150 = scmp.ne.s32.totalorder %s139, %s140
    %p151 = scmp.eq.s32.totalorder %s16, 0
    %p152 = por %p150, %p151
    %p153 = scmp.ne.s32.totalorder %s139, %s140
    %p154 = scmp.eq.s32.totalorder %s17, 1
    %p155 = por %p153, %p154
    %p157 = scmp.ne.s32.totalorder %s140, %s156
    %p158 = scmp.eq.s32.totalorder %s17, 0
    %p159 = por %p157, %p158
    %p160 = scmp.le.s32.totalorder 1, %s11
    %p161 = scmp.lt.s32.totalorder %s11, 3
    %p162 = pnand %p160, %p161
    %p163 = pneg %p162
    // Predicated region
    $region9: #{critic_forward.1} parent=5 // pred_check
      _
    $region10: #{critic_forward.1} parent=5 // pred_check_branch
      %165 = sbr.rel (%p162) target = $region12
    $region11: #{critic_forward.1} parent=5 // pred_region
      %s166 = ssub.s32 %s11, 1
      // Predicated region
      $region13: #{critic_forward.1} parent=11 // pred_check
        %p167 = pneg %p84
      $region14: #{critic_forward.1} parent=11 // pred_check_branch
        %169 = sbr.rel (%p167) target = $region16
      $region15: #{critic_forward.1} parent=11 // pred_region
        _
      $region16: #{critic_forward.1} parent=11 // pred_fallthru
        _
      // Predicated region
      $region17: #{critic_forward.1} parent=11 // pred_check
        %p170 = pneg %p105
      $region18: #{critic_forward.1} parent=11 // pred_check_branch
        %172 = sbr.rel (%p170) target = $region20
      $region19: #{critic_forward.1} parent=11 // pred_region
        _
      $region20: #{critic_forward.1} parent=11 // pred_fallthru
        _
      // Predicated region
      $region21: #{critic_forward.1} parent=11 // pred_check
        %p173 = pneg %p126
      $region22: #{critic_forward.1} parent=11 // pred_check_branch
        %175 = sbr.rel (%p173) target = $region24
      $region23: #{critic_forward.1} parent=11 // pred_region
        _
      $region24: #{critic_forward.1} parent=11 // pred_fallthru
        _
    $region12: #{critic_forward.1} parent=5 // pred_fallthru
      _
    %p176 = scmp.lt.s32.totalorder %s11, 2
    // Predicated region
    $region25: #{critic_forward.1} parent=5 // pred_check
      %p177 = pneg %p176
    $region26: #{critic_forward.1} parent=5 // pred_check_branch
      %179 = sbr.rel (%p177) target = $region28
    $region27: #{critic_forward.1} parent=5 // pred_region
      // Predicated region
      $region29: #{critic_forward.1} parent=27 // pred_check
        %p180 = pneg %p31
      $region30: #{critic_forward.1} parent=27 // pred_check_branch
        %182 = sbr.rel (%p180) target = $region32
      $region31: #{critic_forward.1} parent=27 // pred_region
        %s183 = smul.u32 32, %s11
        %p184 = scmp.lt.s32.totalorder %s183, 63
        %s185 = scalar_select %p184, %s183, 63
        %s186 = smul.addr %s185, 8
        %s187 = scalar_lea.vmem %s0, %s186
        %s188 = smul.u32 32, %s11
      $region32: #{critic_forward.1} parent=27 // pred_fallthru
        _
      // Predicated region
      $region33: #{critic_forward.1} parent=27 // pred_check
        %p189 = pneg %p57
      $region34: #{critic_forward.1} parent=27 // pred_check_branch
        %191 = sbr.rel (%p189) target = $region36
      $region35: #{critic_forward.1} parent=27 // pred_region
        %s192 = smul.u32 32, %s11
        %p193 = scmp.lt.s32.totalorder %s192, 63
        %s194 = scalar_select %p193, %s192, 63
        %s195 = smul.addr %s194, 8
        %s196 = scalar_lea.vmem %s1, %s195
        %s197 = smul.u32 32, %s11
      $region36: #{critic_forward.1} parent=27 // pred_fallthru
        _
    $region28: #{critic_forward.1} parent=5 // pred_fallthru
      _
    %p198 = scmp.le.s32.totalorder 1, %s11
    %p199 = scmp.lt.s32.totalorder %s11, 3
    %p200 = pnand %p198, %p199
    %p201 = pneg %p200
    // Predicated region
    $region37: #{critic_forward.1} parent=5 // pred_check
      _
    $region38: #{critic_forward.1} parent=5 // pred_check_branch
      %203 = sbr.rel (%p200) target = $region40
    $region39: #{critic_forward.1} parent=5 // pred_region
      %s204 = ssub.s32 %s11, 1
      %s205 = smul.u32 32, %s16
      %p206 = scmp.lt.s32.totalorder %s205, 63
      %s207 = scalar_select %p206, %s205, 63
      %s208 = smul.addr %s207, 8
      %s209 = scalar_lea.vmem %s0, %s208
      %p210 = pneg %p37
      %p211 = pneg %p34
      %s212 = smul.u32 32, %s16
      %p213 = scmp.lt.s32.totalorder %s212, 63
      %s214 = scalar_select %p213, %s212, 63
      %s215 = smul.addr %s214, 8
      %s216 = scalar_lea.vmem %s1, %s215
      %p217 = pneg %p63
      %p218 = pneg %p60
      %p219 = pneg %p84
      %p220 = pneg %p81
      %p221 = pneg %p105
      %p222 = pneg %p102
      %p223 = pneg %p126
      %p224 = pneg %p123
      %p225 = pneg %p152
      %p226 = pneg %p149
      %s227 = smul.u32 32, %s16
      %p228 = scmp.lt.s32.totalorder %s227, 63
      %s229 = scalar_select %p228, %s227, 63
      %s230 = smul.addr %s229, 8
      %s231 = scalar_lea.vmem %s5, %s230
      %s232 = smul.u32 32, %s16
      %p233 = scmp.lt.s32.totalorder %s232, 63
      %s234 = scalar_select %p233, %s232, 63
      %s235 = smul.addr %s234, 8
      %s236 = scalar_lea.vmem %s0, %s235
      %s237 = smul.u32 32, %s16
      %s238 = smul.u32 32, %s16
      %p239 = scmp.lt.s32.totalorder %s238, 63
      %s240 = scalar_select %p239, %s238, 63
      %s241 = smul.addr %s240, 8
      %s242 = scalar_lea.vmem %s1, %s241
      %s243 = smul.u32 32, %s16
      %s244 = smul.u32 32, %s16
      %p245 = scmp.lt.s32.totalorder %s244, 63
      %s246 = scalar_select %p245, %s244, 63
      %s247 = smul.addr %s246, 8
      %s248 = scalar_lea.vmem %s5, %s247
      %s249 = smul.u32 32, %s16
      %v251 = vld [vmem:[%s236] sm:$0xff]
      %v252 = vld [vmem:[%s236 + $0x8] sm:$0xff]
      %v253 = vld [vmem:[%s236 + $0x10] sm:$0xff]
      %v254 = vld [vmem:[%s236 + $0x18] sm:$0xff]
      %v255 = vld [vmem:[%s236 + $0x20] sm:$0xff]
      %v256 = vld [vmem:[%s236 + $0x28] sm:$0xff]
      %v257 = vld [vmem:[%s236 + $0x30] sm:$0xff]
      %v258 = vld [vmem:[%s236 + $0x38] sm:$0xff]
      %v259 = vld [vmem:[%s236 + $0x40] sm:$0xff]
      %v260 = vld [vmem:[%s236 + $0x48] sm:$0xff]
      %v261 = vld [vmem:[%s236 + $0x50] sm:$0xff]
      %v262 = vld [vmem:[%s236 + $0x58] sm:$0xff]
      %v263 = vld [vmem:[%s236 + $0x60] sm:$0xff]
      %v264 = vld [vmem:[%s236 + $0x68] sm:$0xff]
      %v265 = vld [vmem:[%s236 + $0x70] sm:$0xff]
      %v266 = vld [vmem:[%s236 + $0x78] sm:$0xff]
      %v267 = vld [vmem:[%s236 + $0x80] sm:$0xff]
      %v268 = vld [vmem:[%s236 + $0x88] sm:$0xff]
      %v269 = vld [vmem:[%s236 + $0x90] sm:$0xff]
      %v270 = vld [vmem:[%s236 + $0x98] sm:$0xff]
      %v271 = vld [vmem:[%s236 + $0xa0] sm:$0xff]
      %v272 = vld [vmem:[%s236 + $0xa8] sm:$0xff]
      %v273 = vld [vmem:[%s236 + $0xb0] sm:$0xff]
      %v274 = vld [vmem:[%s236 + $0xb8] sm:$0xff]
      %v275 = vld [vmem:[%s236 + $0xc0] sm:$0xff]
      %v276 = vld [vmem:[%s236 + $0xc8] sm:$0xff]
      %v277 = vld [vmem:[%s236 + $0xd0] sm:$0xff]
      %v278 = vld [vmem:[%s236 + $0xd8] sm:$0xff]
      %v279 = vld [vmem:[%s236 + $0xe0] sm:$0xff]
      %v280 = vld [vmem:[%s236 + $0xe8] sm:$0xff]
      %v281 = vld [vmem:[%s236 + $0xf0] sm:$0xff]
      %v282 = vld [vmem:[%s236 + $0xf8] sm:$0xff]
      %v283 = vld [vmem:[%s2] sm:$0x1]
      %v284 = vperm.slane %v283, 0
      %v285 = vsub.f32 %v251, %v284
      %v286 = vsub.f32 %v252, %v284
      %v287 = vsub.f32 %v253, %v284
      %v288 = vsub.f32 %v254, %v284
      %v289 = vsub.f32 %v255, %v284
      %v290 = vsub.f32 %v256, %v284
      %v291 = vsub.f32 %v257, %v284
      %v292 = vsub.f32 %v258, %v284
      %v293 = vsub.f32 %v259, %v284
      %v294 = vsub.f32 %v260, %v284
      %v295 = vsub.f32 %v261, %v284
      %v296 = vsub.f32 %v262, %v284
      %v297 = vsub.f32 %v263, %v284
      %v298 = vsub.f32 %v264, %v284
      %v299 = vsub.f32 %v265, %v284
      %v300 = vsub.f32 %v266, %v284
      %v301 = vsub.f32 %v267, %v284
      %v302 = vsub.f32 %v268, %v284
      %v303 = vsub.f32 %v269, %v284
      %v304 = vsub.f32 %v270, %v284
      %v305 = vsub.f32 %v271, %v284
      %v306 = vsub.f32 %v272, %v284
      %v307 = vsub.f32 %v273, %v284
      %v308 = vsub.f32 %v274, %v284
      %v309 = vsub.f32 %v275, %v284
      %v310 = vsub.f32 %v276, %v284
      %v311 = vsub.f32 %v277, %v284
      %v312 = vsub.f32 %v278, %v284
      %v313 = vsub.f32 %v279, %v284
      %v314 = vsub.f32 %v280, %v284
      %v315 = vsub.f32 %v281, %v284
      %v316 = vsub.f32 %v282, %v284
      %v317 = vld [vmem:[%s2 + $0x1] sm:$0x1]
      %v318 = vperm.slane %v317, 0
      %v319 = vmul.f32 %v285, %v318
      %v320 = vmul.f32 %v286, %v318
      %v321 = vmul.f32 %v287, %v318
      %v322 = vmul.f32 %v288, %v318
      %v323 = vmul.f32 %v289, %v318
      %v324 = vmul.f32 %v290, %v318
      %v325 = vmul.f32 %v291, %v318
      %v326 = vmul.f32 %v292, %v318
      %v327 = vmul.f32 %v293, %v318
      %v328 = vmul.f32 %v294, %v318
      %v329 = vmul.f32 %v295, %v318
      %v330 = vmul.f32 %v296, %v318
      %v331 = vmul.f32 %v297, %v318
      %v332 = vmul.f32 %v298, %v318
      %v333 = vmul.f32 %v299, %v318
      %v334 = vmul.f32 %v300, %v318
      %v335 = vmul.f32 %v301, %v318
      %v336 = vmul.f32 %v302, %v318
      %v337 = vmul.f32 %v303, %v318
      %v338 = vmul.f32 %v304, %v318
      %v339 = vmul.f32 %v305, %v318
      %v340 = vmul.f32 %v306, %v318
      %v341 = vmul.f32 %v307, %v318
      %v342 = vmul.f32 %v308, %v318
      %v343 = vmul.f32 %v309, %v318
      %v344 = vmul.f32 %v310, %v318
      %v345 = vmul.f32 %v311, %v318
      %v346 = vmul.f32 %v312, %v318
      %v347 = vmul.f32 %v313, %v318
      %v348 = vmul.f32 %v314, %v318
      %v349 = vmul.f32 %v315, %v318
      %v350 = vmul.f32 %v316, %v318
      %v351 = vpack.c.bf16 %v320, %v319
      %v352 = vpack.c.bf16 %v322, %v321
      %v353 = vpack.c.bf16 %v324, %v323
      %v354 = vpack.c.bf16 %v326, %v325
      %v355 = vpack.c.bf16 %v328, %v327
      %v356 = vpack.c.bf16 %v330, %v329
      %v357 = vpack.c.bf16 %v332, %v331
      %v358 = vpack.c.bf16 %v334, %v333
      %v359 = vpack.c.bf16 %v336, %v335
      %v360 = vpack.c.bf16 %v338, %v337
      %v361 = vpack.c.bf16 %v340, %v339
      %v362 = vpack.c.bf16 %v342, %v341
      %v363 = vpack.c.bf16 %v344, %v343
      %v364 = vpack.c.bf16 %v346, %v345
      %v365 = vpack.c.bf16 %v348, %v347
      %v366 = vpack.c.bf16 %v350, %v349
      %v367 = vld [vmem:[%s3] sm:$0xf]
      %v368 = vld [vmem:[%s3 + $0x4] sm:$0xf]
      %v369 = vld [vmem:[%s4] sm:$0x1]
      %v370 = vperm.slane %v369, 0
      %v373 = vunpack.c.l.b16 %v367
      %v374 = vunpack.c.l.b16 %v368
      %v375 = vpack.c.b16 %v374, %v373
      %vm377 = vcmask 130048
      %v379 = vsel %vm377, %v351, 0
      %v382 = vsel %vm377, %v352, 0
      %v385 = vsel %vm377, %v353, 0
      %v388 = vsel %vm377, %v354, 0
      %v391 = vsel %vm377, %v355, 0
      %v394 = vsel %vm377, %v356, 0
      %v397 = vsel %vm377, %v357, 0
      %v400 = vsel %vm377, %v358, 0
      %v403 = vsel %vm377, %v359, 0
      %v406 = vsel %vm377, %v360, 0
      %v409 = vsel %vm377, %v361, 0
      %v412 = vsel %vm377, %v362, 0
      %v415 = vsel %vm377, %v363, 0
      %v418 = vsel %vm377, %v364, 0
      %v421 = vsel %vm377, %v365, 0
      %v424 = vsel %vm377, %v366, 0
      %426 = vmatpush.bf16.msra.mxu0 0
      %427 = vmatpush.bf16.msra.mxu0 0
      %428 = vmatpush.bf16.msra.mxu0 0
      %429 = vmatpush.bf16.msra.mxu0 0
      %430 = vmatpush.bf16.msra.mxu0 0
      %431 = vmatpush.bf16.msra.mxu0 0
      %432 = vmatpush.bf16.msra.mxu0 0
      %433 = vmatpush.bf16.msra.mxu0 %v375
      %434 = vmatmul.bf16.gmra.mxu0 %v379
      %v435 = vpop.f32.mrf.mxu0
      %v436 = vadd.f32 %v370, %v435
      %v437 = vpop.f32.mrf.mxu0
      %v438 = vadd.f32 %v370, %v437
      %439 = vmatmul.bf16.gmra.mxu0 %v382
      %v440 = vpop.f32.mrf.mxu0
      %v441 = vadd.f32 %v370, %v440
      %v442 = vpop.f32.mrf.mxu0
      %v443 = vadd.f32 %v370, %v442
      %444 = vmatmul.bf16.gmra.mxu0 %v385
      %v445 = vpop.f32.mrf.mxu0
      %v446 = vadd.f32 %v370, %v445
      %v447 = vpop.f32.mrf.mxu0
      %v448 = vadd.f32 %v370, %v447
      %449 = vmatmul.bf16.gmra.mxu0 %v388
      %v450 = vpop.f32.mrf.mxu0
      %v451 = vadd.f32 %v370, %v450
      %v452 = vpop.f32.mrf.mxu0
      %v453 = vadd.f32 %v370, %v452
      %454 = vmatmul.bf16.gmra.mxu0 %v391
      %v455 = vpop.f32.mrf.mxu0
      %v456 = vadd.f32 %v370, %v455
      %v457 = vpop.f32.mrf.mxu0
      %v458 = vadd.f32 %v370, %v457
      %459 = vmatmul.bf16.gmra.mxu0 %v394
      %v460 = vpop.f32.mrf.mxu0
      %v461 = vadd.f32 %v370, %v460
      %v462 = vpop.f32.mrf.mxu0
      %v463 = vadd.f32 %v370, %v462
      %464 = vmatmul.bf16.gmra.mxu0 %v397
      %v465 = vpop.f32.mrf.mxu0
      %v466 = vadd.f32 %v370, %v465
      %v467 = vpop.f32.mrf.mxu0
      %v468 = vadd.f32 %v370, %v467
      %469 = vmatmul.bf16.gmra.mxu0 %v400
      %v470 = vpop.f32.mrf.mxu0
      %v471 = vadd.f32 %v370, %v470
      %v472 = vpop.f32.mrf.mxu0
      %v473 = vadd.f32 %v370, %v472
      %474 = vmatmul.bf16.gmra.mxu0 %v403
      %v475 = vpop.f32.mrf.mxu0
      %v476 = vadd.f32 %v370, %v475
      %v477 = vpop.f32.mrf.mxu0
      %v478 = vadd.f32 %v370, %v477
      %479 = vmatmul.bf16.gmra.mxu0 %v406
      %v480 = vpop.f32.mrf.mxu0
      %v481 = vadd.f32 %v370, %v480
      %v482 = vpop.f32.mrf.mxu0
      %v483 = vadd.f32 %v370, %v482
      %484 = vmatmul.bf16.gmra.mxu0 %v409
      %v485 = vpop.f32.mrf.mxu0
      %v486 = vadd.f32 %v370, %v485
      %v487 = vpop.f32.mrf.mxu0
      %v488 = vadd.f32 %v370, %v487
      %489 = vmatmul.bf16.gmra.mxu0 %v412
      %v490 = vpop.f32.mrf.mxu0
      %v491 = vadd.f32 %v370, %v490
      %v492 = vpop.f32.mrf.mxu0
      %v493 = vadd.f32 %v370, %v492
      %494 = vmatmul.bf16.gmra.mxu0 %v415
      %v495 = vpop.f32.mrf.mxu0
      %v496 = vadd.f32 %v370, %v495
      %v497 = vpop.f32.mrf.mxu0
      %v498 = vadd.f32 %v370, %v497
      %499 = vmatmul.bf16.gmra.mxu0 %v418
      %v500 = vpop.f32.mrf.mxu0
      %v501 = vadd.f32 %v370, %v500
      %v502 = vpop.f32.mrf.mxu0
      %v503 = vadd.f32 %v370, %v502
      %504 = vmatmul.bf16.gmra.mxu0 %v421
      %v505 = vpop.f32.mrf.mxu0
      %v506 = vadd.f32 %v370, %v505
      %v507 = vpop.f32.mrf.mxu0
      %v508 = vadd.f32 %v370, %v507
      %509 = vmatmul.bf16.gmra.mxu0 %v424
      %v510 = vpop.f32.mrf.mxu0
      %v511 = vadd.f32 %v370, %v510
      %v512 = vpop.f32.mrf.mxu0
      %v513 = vadd.f32 %v370, %v512
      %514 = vdwg.mxu0
      %v515 = vmax.f32 %v436, 0.0
      %v516 = vmax.f32 %v438, 0.0
      %v517 = vmax.f32 %v441, 0.0
      %v518 = vmax.f32 %v443, 0.0
      %v519 = vmax.f32 %v446, 0.0
      %v520 = vmax.f32 %v448, 0.0
      %v521 = vmax.f32 %v451, 0.0
      %v522 = vmax.f32 %v453, 0.0
      %v523 = vmax.f32 %v456, 0.0
      %v524 = vmax.f32 %v458, 0.0
      %v525 = vmax.f32 %v461, 0.0
      %v526 = vmax.f32 %v463, 0.0
      %v527 = vmax.f32 %v466, 0.0
      %v528 = vmax.f32 %v468, 0.0
      %v529 = vmax.f32 %v471, 0.0
      %v530 = vmax.f32 %v473, 0.0
      %v531 = vmax.f32 %v476, 0.0
      %v532 = vmax.f32 %v478, 0.0
      %v533 = vmax.f32 %v481, 0.0
      %v534 = vmax.f32 %v483, 0.0
      %v535 = vmax.f32 %v486, 0.0
      %v536 = vmax.f32 %v488, 0.0
      %v537 = vmax.f32 %v491, 0.0
      %v538 = vmax.f32 %v493, 0.0
      %v539 = vmax.f32 %v496, 0.0
      %v540 = vmax.f32 %v498, 0.0
      %v541 = vmax.f32 %v501, 0.0
      %v542 = vmax.f32 %v503, 0.0
      %v543 = vmax.f32 %v506, 0.0
      %v544 = vmax.f32 %v508, 0.0
      %v545 = vmax.f32 %v511, 0.0
      %v546 = vmax.f32 %v513, 0.0
      %v547 = vpack.c.bf16 %v516, %v515
      %v548 = vpack.c.bf16 %v518, %v517
      %v549 = vpack.c.bf16 %v520, %v519
      %v550 = vpack.c.bf16 %v522, %v521
      %v551 = vpack.c.bf16 %v524, %v523
      %v552 = vpack.c.bf16 %v526, %v525
      %v553 = vpack.c.bf16 %v528, %v527
      %v554 = vpack.c.bf16 %v530, %v529
      %v555 = vpack.c.bf16 %v532, %v531
      %v556 = vpack.c.bf16 %v534, %v533
      %v557 = vpack.c.bf16 %v536, %v535
      %v558 = vpack.c.bf16 %v538, %v537
      %v559 = vpack.c.bf16 %v540, %v539
      %v560 = vpack.c.bf16 %v542, %v541
      %v561 = vpack.c.bf16 %v544, %v543
      %v562 = vpack.c.bf16 %v546, %v545
      %v563 = vld [vmem:[%s3 + $0x8] sm:$0xf]
      %v564 = vld [vmem:[%s3 + $0xc] sm:$0xf]
      %v565 = vld [vmem:[%s3 + $0x10] sm:$0xf]
      %v566 = vld [vmem:[%s3 + $0x14] sm:$0xf]
      %v567 = vld [vmem:[%s3 + $0x18] sm:$0xf]
      %v568 = vld [vmem:[%s3 + $0x1c] sm:$0xf]
      %v569 = vld [vmem:[%s3 + $0x20] sm:$0xf]
      %v570 = vld [vmem:[%s3 + $0x24] sm:$0xf]
      %v571 = vld [vmem:[%s3 + $0x28] sm:$0xf]
      %v572 = vld [vmem:[%s3 + $0x2c] sm:$0xf]
      %v573 = vld [vmem:[%s3 + $0x30] sm:$0xf]
      %v574 = vld [vmem:[%s3 + $0x34] sm:$0xf]
      %v575 = vld [vmem:[%s3 + $0x38] sm:$0xf]
      %v576 = vld [vmem:[%s3 + $0x3c] sm:$0xf]
      %v577 = vld [vmem:[%s3 + $0x40] sm:$0xf]
      %v578 = vld [vmem:[%s3 + $0x44] sm:$0xf]
      %v579 = vld [vmem:[%s242] sm:$0xff]
      %v580 = vld [vmem:[%s242 + $0x8] sm:$0xff]
      %v581 = vld [vmem:[%s242 + $0x10] sm:$0xff]
      %v582 = vld [vmem:[%s242 + $0x18] sm:$0xff]
      %v583 = vld [vmem:[%s242 + $0x20] sm:$0xff]
      %v584 = vld [vmem:[%s242 + $0x28] sm:$0xff]
      %v585 = vld [vmem:[%s242 + $0x30] sm:$0xff]
      %v586 = vld [vmem:[%s242 + $0x38] sm:$0xff]
      %v587 = vld [vmem:[%s242 + $0x40] sm:$0xff]
      %v588 = vld [vmem:[%s242 + $0x48] sm:$0xff]
      %v589 = vld [vmem:[%s242 + $0x50] sm:$0xff]
      %v590 = vld [vmem:[%s242 + $0x58] sm:$0xff]
      %v591 = vld [vmem:[%s242 + $0x60] sm:$0xff]
      %v592 = vld [vmem:[%s242 + $0x68] sm:$0xff]
      %v593 = vld [vmem:[%s242 + $0x70] sm:$0xff]
      %v594 = vld [vmem:[%s242 + $0x78] sm:$0xff]
      %v595 = vld [vmem:[%s242 + $0x80] sm:$0xff]
      %v596 = vld [vmem:[%s242 + $0x88] sm:$0xff]
      %v597 = vld [vmem:[%s242 + $0x90] sm:$0xff]
      %v598 = vld [vmem:[%s242 + $0x98] sm:$0xff]
      %v599 = vld [vmem:[%s242 + $0xa0] sm:$0xff]
      %v600 = vld [vmem:[%s242 + $0xa8] sm:$0xff]
      %v601 = vld [vmem:[%s242 + $0xb0] sm:$0xff]
      %v602 = vld [vmem:[%s242 + $0xb8] sm:$0xff]
      %v603 = vld [vmem:[%s242 + $0xc0] sm:$0xff]
      %v604 = vld [vmem:[%s242 + $0xc8] sm:$0xff]
      %v605 = vld [vmem:[%s242 + $0xd0] sm:$0xff]
      %v606 = vld [vmem:[%s242 + $0xd8] sm:$0xff]
      %v607 = vld [vmem:[%s242 + $0xe0] sm:$0xff]
      %v608 = vld [vmem:[%s242 + $0xe8] sm:$0xff]
      %v609 = vld [vmem:[%s242 + $0xf0] sm:$0xff]
      %v610 = vld [vmem:[%s242 + $0xf8] sm:$0xff]
      %v611 = vld [vmem:[%s4 + $0x4] sm:$0x1]
      %613 = vset.pattern.permute.xlu0 0
      %614 = vperm.xlu0 %613, %v579
      %v615 = vpop.permute.xlu0 %614
      %618 = vset.pattern.permute.xlu0 0
      %619 = vperm.xlu0 %618, %v580
      %v620 = vpop.permute.xlu0 %619
      %623 = vset.pattern.permute.xlu0 0
      %624 = vperm.xlu0 %623, %v581
      %v625 = vpop.permute.xlu0 %624
      %628 = vset.pattern.permute.xlu0 0
      %629 = vperm.xlu0 %628, %v582
      %v630 = vpop.permute.xlu0 %629
      %633 = vset.pattern.permute.xlu0 0
      %634 = vperm.xlu0 %633, %v583
      %v635 = vpop.permute.xlu0 %634
      %638 = vset.pattern.permute.xlu0 0
      %639 = vperm.xlu0 %638, %v584
      %v640 = vpop.permute.xlu0 %639
      %643 = vset.pattern.permute.xlu0 0
      %644 = vperm.xlu0 %643, %v585
      %v645 = vpop.permute.xlu0 %644
      %648 = vset.pattern.permute.xlu0 0
      %649 = vperm.xlu0 %648, %v586
      %v650 = vpop.permute.xlu0 %649
      %653 = vset.pattern.permute.xlu0 0
      %654 = vperm.xlu0 %653, %v587
      %v655 = vpop.permute.xlu0 %654
      %658 = vset.pattern.permute.xlu0 0
      %659 = vperm.xlu0 %658, %v588
      %v660 = vpop.permute.xlu0 %659
      %663 = vset.pattern.permute.xlu0 0
      %664 = vperm.xlu0 %663, %v589
      %v665 = vpop.permute.xlu0 %664
      %668 = vset.pattern.permute.xlu0 0
      %669 = vperm.xlu0 %668, %v590
      %v670 = vpop.permute.xlu0 %669
      %673 = vset.pattern.permute.xlu0 0
      %674 = vperm.xlu0 %673, %v591
      %v675 = vpop.permute.xlu0 %674
      %678 = vset.pattern.permute.xlu0 0
      %679 = vperm.xlu0 %678, %v592
      %v680 = vpop.permute.xlu0 %679
      %683 = vset.pattern.permute.xlu0 0
      %684 = vperm.xlu0 %683, %v593
      %v685 = vpop.permute.xlu0 %684
      %688 = vset.pattern.permute.xlu0 0
      %689 = vperm.xlu0 %688, %v594
      %v690 = vpop.permute.xlu0 %689
      %693 = vset.pattern.permute.xlu0 0
      %694 = vperm.xlu0 %693, %v595
      %v695 = vpop.permute.xlu0 %694
      %698 = vset.pattern.permute.xlu0 0
      %699 = vperm.xlu0 %698, %v596
      %v700 = vpop.permute.xlu0 %699
      %703 = vset.pattern.permute.xlu0 0
      %704 = vperm.xlu0 %703, %v597
      %v705 = vpop.permute.xlu0 %704
      %708 = vset.pattern.permute.xlu0 0
      %709 = vperm.xlu0 %708, %v598
      %v710 = vpop.permute.xlu0 %709
      %713 = vset.pattern.permute.xlu0 0
      %714 = vperm.xlu0 %713, %v599
      %v715 = vpop.permute.xlu0 %714
      %718 = vset.pattern.permute.xlu0 0
      %719 = vperm.xlu0 %718, %v600
      %v720 = vpop.permute.xlu0 %719
      %723 = vset.pattern.permute.xlu0 0
      %724 = vperm.xlu0 %723, %v601
      %v725 = vpop.permute.xlu0 %724
      %728 = vset.pattern.permute.xlu0 0
      %729 = vperm.xlu0 %728, %v602
      %v730 = vpop.permute.xlu0 %729
      %733 = vset.pattern.permute.xlu0 0
      %734 = vperm.xlu0 %733, %v603
      %v735 = vpop.permute.xlu0 %734
      %738 = vset.pattern.permute.xlu0 0
      %739 = vperm.xlu0 %738, %v604
      %v740 = vpop.permute.xlu0 %739
      %743 = vset.pattern.permute.xlu0 0
      %744 = vperm.xlu0 %743, %v605
      %v745 = vpop.permute.xlu0 %744
      %748 = vset.pattern.permute.xlu0 0
      %749 = vperm.xlu0 %748, %v606
      %v750 = vpop.permute.xlu0 %749
      %753 = vset.pattern.permute.xlu0 0
      %754 = vperm.xlu0 %753, %v607
      %v755 = vpop.permute.xlu0 %754
      %758 = vset.pattern.permute.xlu0 0
      %759 = vperm.xlu0 %758, %v608
      %v760 = vpop.permute.xlu0 %759
      %763 = vset.pattern.permute.xlu0 0
      %764 = vperm.xlu0 %763, %v609
      %v765 = vpop.permute.xlu0 %764
      %768 = vset.pattern.permute.xlu0 0
      %769 = vperm.xlu0 %768, %v610
      %v770 = vpop.permute.xlu0 %769
      %v772 = vperm.slane %v611, 0
      %v773 = vmul.f32 %v615, %v772
      %v774 = vmul.f32 %v620, %v772
      %v775 = vmul.f32 %v625, %v772
      %v776 = vmul.f32 %v630, %v772
      %v777 = vmul.f32 %v635, %v772
      %v778 = vmul.f32 %v640, %v772
      %v779 = vmul.f32 %v645, %v772
      %v780 = vmul.f32 %v650, %v772
      %v781 = vmul.f32 %v655, %v772
      %v782 = vmul.f32 %v660, %v772
      %v783 = vmul.f32 %v665, %v772
      %v784 = vmul.f32 %v670, %v772
      %v785 = vmul.f32 %v675, %v772
      %v786 = vmul.f32 %v680, %v772
      %v787 = vmul.f32 %v685, %v772
      %v788 = vmul.f32 %v690, %v772
      %v789 = vmul.f32 %v695, %v772
      %v790 = vmul.f32 %v700, %v772
      %v791 = vmul.f32 %v705, %v772
      %v792 = vmul.f32 %v710, %v772
      %v793 = vmul.f32 %v715, %v772
      %v794 = vmul.f32 %v720, %v772
      %v795 = vmul.f32 %v725, %v772
      %v796 = vmul.f32 %v730, %v772
      %v797 = vmul.f32 %v735, %v772
      %v798 = vmul.f32 %v740, %v772
      %v799 = vmul.f32 %v745, %v772
      %v800 = vmul.f32 %v750, %v772
      %v801 = vmul.f32 %v755, %v772
      %v802 = vmul.f32 %v760, %v772
      %v803 = vmul.f32 %v765, %v772
      %v804 = vmul.f32 %v770, %v772
      %v821 = vunpack.c.l.b16 %v563
      %v822 = vunpack.c.l.b16 %v564
      %v823 = vunpack.c.l.b16 %v565
      %v824 = vunpack.c.l.b16 %v566
      %v825 = vunpack.c.l.b16 %v567
      %v826 = vunpack.c.l.b16 %v568
      %v827 = vunpack.c.l.b16 %v569
      %v828 = vunpack.c.l.b16 %v570
      %v829 = vunpack.c.l.b16 %v571
      %v830 = vunpack.c.l.b16 %v572
      %v831 = vunpack.c.l.b16 %v573
      %v832 = vunpack.c.l.b16 %v574
      %v833 = vunpack.c.l.b16 %v575
      %v834 = vunpack.c.l.b16 %v576
      %v835 = vunpack.c.l.b16 %v577
      %v836 = vunpack.c.l.b16 %v578
      %v837 = vpack.c.b16 %v822, %v821
      %v838 = vpack.c.b16 %v824, %v823
      %v839 = vpack.c.b16 %v826, %v825
      %v840 = vpack.c.b16 %v828, %v827
      %v841 = vpack.c.b16 %v830, %v829
      %v842 = vpack.c.b16 %v832, %v831
      %v843 = vpack.c.b16 %v834, %v833
      %v844 = vpack.c.b16 %v836, %v835
      %853 = vmatpush.bf16.msra.mxu0 %v844
      %854 = vmatpush.bf16.msra.mxu0 %v843
      %855 = vmatpush.bf16.msra.mxu0 %v842
      %856 = vmatpush.bf16.msra.mxu0 %v841
      %857 = vmatpush.bf16.msra.mxu0 %v840
      %858 = vmatpush.bf16.msra.mxu0 %v839
      %859 = vmatpush.bf16.msra.mxu0 %v838
      %860 = vmatpush.bf16.msra.mxu0 %v837
      %861 = vmatmul.bf16.gmra.mxu0 %v547
      %v862 = vpop.f32.mrf.mxu0
      %v863 = vadd.f32 %v773, %v862
      %v864 = vpop.f32.mrf.mxu0
      %v865 = vadd.f32 %v774, %v864
      %866 = vmatmul.bf16.gmra.mxu0 %v548
      %v867 = vpop.f32.mrf.mxu0
      %v868 = vadd.f32 %v775, %v867
      %v869 = vpop.f32.mrf.mxu0
      %v870 = vadd.f32 %v776, %v869
      %871 = vmatmul.bf16.gmra.mxu0 %v549
      %v872 = vpop.f32.mrf.mxu0
      %v873 = vadd.f32 %v777, %v872
      %v874 = vpop.f32.mrf.mxu0
      %v875 = vadd.f32 %v778, %v874
      %876 = vmatmul.bf16.gmra.mxu0 %v550
      %v877 = vpop.f32.mrf.mxu0
      %v878 = vadd.f32 %v779, %v877
      %v879 = vpop.f32.mrf.mxu0
      %v880 = vadd.f32 %v780, %v879
      %881 = vmatmul.bf16.gmra.mxu0 %v551
      %v882 = vpop.f32.mrf.mxu0
      %v883 = vadd.f32 %v781, %v882
      %v884 = vpop.f32.mrf.mxu0
      %v885 = vadd.f32 %v782, %v884
      %886 = vmatmul.bf16.gmra.mxu0 %v552
      %v887 = vpop.f32.mrf.mxu0
      %v888 = vadd.f32 %v783, %v887
      %v889 = vpop.f32.mrf.mxu0
      %v890 = vadd.f32 %v784, %v889
      %891 = vmatmul.bf16.gmra.mxu0 %v553
      %v892 = vpop.f32.mrf.mxu0
      %v893 = vadd.f32 %v785, %v892
      %v894 = vpop.f32.mrf.mxu0
      %v895 = vadd.f32 %v786, %v894
      %896 = vmatmul.bf16.gmra.mxu0 %v554
      %v897 = vpop.f32.mrf.mxu0
      %v898 = vadd.f32 %v787, %v897
      %v899 = vpop.f32.mrf.mxu0
      %v900 = vadd.f32 %v788, %v899
      %901 = vmatmul.bf16.gmra.mxu0 %v555
      %v902 = vpop.f32.mrf.mxu0
      %v903 = vadd.f32 %v789, %v902
      %v904 = vpop.f32.mrf.mxu0
      %v905 = vadd.f32 %v790, %v904
      %906 = vmatmul.bf16.gmra.mxu0 %v556
      %v907 = vpop.f32.mrf.mxu0
      %v908 = vadd.f32 %v791, %v907
      %v909 = vpop.f32.mrf.mxu0
      %v910 = vadd.f32 %v792, %v909
      %911 = vmatmul.bf16.gmra.mxu0 %v557
      %v912 = vpop.f32.mrf.mxu0
      %v913 = vadd.f32 %v793, %v912
      %v914 = vpop.f32.mrf.mxu0
      %v915 = vadd.f32 %v794, %v914
      %916 = vmatmul.bf16.gmra.mxu0 %v558
      %v917 = vpop.f32.mrf.mxu0
      %v918 = vadd.f32 %v795, %v917
      %v919 = vpop.f32.mrf.mxu0
      %v920 = vadd.f32 %v796, %v919
      %921 = vmatmul.bf16.gmra.mxu0 %v559
      %v922 = vpop.f32.mrf.mxu0
      %v923 = vadd.f32 %v797, %v922
      %v924 = vpop.f32.mrf.mxu0
      %v925 = vadd.f32 %v798, %v924
      %926 = vmatmul.bf16.gmra.mxu0 %v560
      %v927 = vpop.f32.mrf.mxu0
      %v928 = vadd.f32 %v799, %v927
      %v929 = vpop.f32.mrf.mxu0
      %v930 = vadd.f32 %v800, %v929
      %931 = vmatmul.bf16.gmra.mxu0 %v561
      %v932 = vpop.f32.mrf.mxu0
      %v933 = vadd.f32 %v801, %v932
      %v934 = vpop.f32.mrf.mxu0
      %v935 = vadd.f32 %v802, %v934
      %936 = vmatmul.bf16.gmra.mxu0 %v562
      %v937 = vpop.f32.mrf.mxu0
      %v938 = vadd.f32 %v803, %v937
      %v939 = vpop.f32.mrf.mxu0
      %v940 = vadd.f32 %v804, %v939
      %941 = vdwg.mxu0
      %v942 = vld [vmem:[%s4 + $0x5] sm:$0x1]
      %943 = vset.pattern.permute.xlu0 1
      %944 = vperm.xlu0 %943, %v579
      %v945 = vpop.permute.xlu0 %944
      %947 = vset.pattern.permute.xlu0 1
      %948 = vperm.xlu0 %947, %v580
      %v949 = vpop.permute.xlu0 %948
      %951 = vset.pattern.permute.xlu0 1
      %952 = vperm.xlu0 %951, %v581
      %v953 = vpop.permute.xlu0 %952
      %955 = vset.pattern.permute.xlu0 1
      %956 = vperm.xlu0 %955, %v582
      %v957 = vpop.permute.xlu0 %956
      %959 = vset.pattern.permute.xlu0 1
      %960 = vperm.xlu0 %959, %v583
      %v961 = vpop.permute.xlu0 %960
      %963 = vset.pattern.permute.xlu0 1
      %964 = vperm.xlu0 %963, %v584
      %v965 = vpop.permute.xlu0 %964
      %967 = vset.pattern.permute.xlu0 1
      %968 = vperm.xlu0 %967, %v585
      %v969 = vpop.permute.xlu0 %968
      %971 = vset.pattern.permute.xlu0 1
      %972 = vperm.xlu0 %971, %v586
      %v973 = vpop.permute.xlu0 %972
      %975 = vset.pattern.permute.xlu0 1
      %976 = vperm.xlu0 %975, %v587
      %v977 = vpop.permute.xlu0 %976
      %979 = vset.pattern.permute.xlu0 1
      %980 = vperm.xlu0 %979, %v588
      %v981 = vpop.permute.xlu0 %980
      %983 = vset.pattern.permute.xlu0 1
      %984 = vperm.xlu0 %983, %v589
      %v985 = vpop.permute.xlu0 %984
      %987 = vset.pattern.permute.xlu0 1
      %988 = vperm.xlu0 %987, %v590
      %v989 = vpop.permute.xlu0 %988
      %991 = vset.pattern.permute.xlu0 1
      %992 = vperm.xlu0 %991, %v591
      %v993 = vpop.permute.xlu0 %992
      %995 = vset.pattern.permute.xlu0 1
      %996 = vperm.xlu0 %995, %v592
      %v997 = vpop.permute.xlu0 %996
      %999 = vset.pattern.permute.xlu0 1
      %1000 = vperm.xlu0 %999, %v593
      %v1001 = vpop.permute.xlu0 %1000
      %1003 = vset.pattern.permute.xlu0 1
      %1004 = vperm.xlu0 %1003, %v594
      %v1005 = vpop.permute.xlu0 %1004
      %1007 = vset.pattern.permute.xlu0 1
      %1008 = vperm.xlu0 %1007, %v595
      %v1009 = vpop.permute.xlu0 %1008
      %1011 = vset.pattern.permute.xlu0 1
      %1012 = vperm.xlu0 %1011, %v596
      %v1013 = vpop.permute.xlu0 %1012
      %1015 = vset.pattern.permute.xlu0 1
      %1016 = vperm.xlu0 %1015, %v597
      %v1017 = vpop.permute.xlu0 %1016
      %1019 = vset.pattern.permute.xlu0 1
      %1020 = vperm.xlu0 %1019, %v598
      %v1021 = vpop.permute.xlu0 %1020
      %1023 = vset.pattern.permute.xlu0 1
      %1024 = vperm.xlu0 %1023, %v599
      %v1025 = vpop.permute.xlu0 %1024
      %1027 = vset.pattern.permute.xlu0 1
      %1028 = vperm.xlu0 %1027, %v600
      %v1029 = vpop.permute.xlu0 %1028
      %1031 = vset.pattern.permute.xlu0 1
      %1032 = vperm.xlu0 %1031, %v601
      %v1033 = vpop.permute.xlu0 %1032
      %1035 = vset.pattern.permute.xlu0 1
      %1036 = vperm.xlu0 %1035, %v602
      %v1037 = vpop.permute.xlu0 %1036
      %1039 = vset.pattern.permute.xlu0 1
      %1040 = vperm.xlu0 %1039, %v603
      %v1041 = vpop.permute.xlu0 %1040
      %1043 = vset.pattern.permute.xlu0 1
      %1044 = vperm.xlu0 %1043, %v604
      %v1045 = vpop.permute.xlu0 %1044
      %1047 = vset.pattern.permute.xlu0 1
      %1048 = vperm.xlu0 %1047, %v605
      %v1049 = vpop.permute.xlu0 %1048
      %1051 = vset.pattern.permute.xlu0 1
      %1052 = vperm.xlu0 %1051, %v606
      %v1053 = vpop.permute.xlu0 %1052
      %1055 = vset.pattern.permute.xlu0 1
      %1056 = vperm.xlu0 %1055, %v607
      %v1057 = vpop.permute.xlu0 %1056
      %1059 = vset.pattern.permute.xlu0 1
      %1060 = vperm.xlu0 %1059, %v608
      %v1061 = vpop.permute.xlu0 %1060
      %1063 = vset.pattern.permute.xlu0 1
      %1064 = vperm.xlu0 %1063, %v609
      %v1065 = vpop.permute.xlu0 %1064
      %1067 = vset.pattern.permute.xlu0 1
      %1068 = vperm.xlu0 %1067, %v610
      %v1069 = vpop.permute.xlu0 %1068
      %v1071 = vperm.slane %v942, 0
      %v1072 = vmul.f32 %v945, %v1071
      %v1073 = vmul.f32 %v949, %v1071
      %v1074 = vmul.f32 %v953, %v1071
      %v1075 = vmul.f32 %v957, %v1071
      %v1076 = vmul.f32 %v961, %v1071
      %v1077 = vmul.f32 %v965, %v1071
      %v1078 = vmul.f32 %v969, %v1071
      %v1079 = vmul.f32 %v973, %v1071
      %v1080 = vmul.f32 %v977, %v1071
      %v1081 = vmul.f32 %v981, %v1071
      %v1082 = vmul.f32 %v985, %v1071
      %v1083 = vmul.f32 %v989, %v1071
      %v1084 = vmul.f32 %v993, %v1071
      %v1085 = vmul.f32 %v997, %v1071
      %v1086 = vmul.f32 %v1001, %v1071
      %v1087 = vmul.f32 %v1005, %v1071
      %v1088 = vmul.f32 %v1009, %v1071
      %v1089 = vmul.f32 %v1013, %v1071
      %v1090 = vmul.f32 %v1017, %v1071
      %v1091 = vmul.f32 %v1021, %v1071
      %v1092 = vmul.f32 %v1025, %v1071
      %v1093 = vmul.f32 %v1029, %v1071
      %v1094 = vmul.f32 %v1033, %v1071
      %v1095 = vmul.f32 %v1037, %v1071
      %v1096 = vmul.f32 %v1041, %v1071
      %v1097 = vmul.f32 %v1045, %v1071
      %v1098 = vmul.f32 %v1049, %v1071
      %v1099 = vmul.f32 %v1053, %v1071
      %v1100 = vmul.f32 %v1057, %v1071
      %v1101 = vmul.f32 %v1061, %v1071
      %v1102 = vmul.f32 %v1065, %v1071
      %v1103 = vmul.f32 %v1069, %v1071
      %v1104 = vadd.f32 %v863, %v1072
      %v1105 = vadd.f32 %v865, %v1073
      %v1106 = vadd.f32 %v868, %v1074
      %v1107 = vadd.f32 %v870, %v1075
      %v1108 = vadd.f32 %v873, %v1076
      %v1109 = vadd.f32 %v875, %v1077
      %v1110 = vadd.f32 %v878, %v1078
      %v1111 = vadd.f32 %v880, %v1079
      %v1112 = vadd.f32 %v883, %v1080
      %v1113 = vadd.f32 %v885, %v1081
      %v1114 = vadd.f32 %v888, %v1082
      %v1115 = vadd.f32 %v890, %v1083
      %v1116 = vadd.f32 %v893, %v1084
      %v1117 = vadd.f32 %v895, %v1085
      %v1118 = vadd.f32 %v898, %v1086
      %v1119 = vadd.f32 %v900, %v1087
      %v1120 = vadd.f32 %v903, %v1088
      %v1121 = vadd.f32 %v905, %v1089
      %v1122 = vadd.f32 %v908, %v1090
      %v1123 = vadd.f32 %v910, %v1091
      %v1124 = vadd.f32 %v913, %v1092
      %v1125 = vadd.f32 %v915, %v1093
      %v1126 = vadd.f32 %v918, %v1094
      %v1127 = vadd.f32 %v920, %v1095
      %v1128 = vadd.f32 %v923, %v1096
      %v1129 = vadd.f32 %v925, %v1097
      %v1130 = vadd.f32 %v928, %v1098
      %v1131 = vadd.f32 %v930, %v1099
      %v1132 = vadd.f32 %v933, %v1100
      %v1133 = vadd.f32 %v935, %v1101
      %v1134 = vadd.f32 %v938, %v1102
      %v1135 = vadd.f32 %v940, %v1103
      %v1136 = vld [vmem:[%s4 + $0x6] sm:$0x1]
      %1137 = vset.pattern.permute.xlu0 2
      %1138 = vperm.xlu0 %1137, %v579
      %v1139 = vpop.permute.xlu0 %1138
      %1141 = vset.pattern.permute.xlu0 2
      %1142 = vperm.xlu0 %1141, %v580
      %v1143 = vpop.permute.xlu0 %1142
      %1145 = vset.pattern.permute.xlu0 2
      %1146 = vperm.xlu0 %1145, %v581
      %v1147 = vpop.permute.xlu0 %1146
      %1149 = vset.pattern.permute.xlu0 2
      %1150 = vperm.xlu0 %1149, %v582
      %v1151 = vpop.permute.xlu0 %1150
      %1153 = vset.pattern.permute.xlu0 2
      %1154 = vperm.xlu0 %1153, %v583
      %v1155 = vpop.permute.xlu0 %1154
      %1157 = vset.pattern.permute.xlu0 2
      %1158 = vperm.xlu0 %1157, %v584
      %v1159 = vpop.permute.xlu0 %1158
      %1161 = vset.pattern.permute.xlu0 2
      %1162 = vperm.xlu0 %1161, %v585
      %v1163 = vpop.permute.xlu0 %1162
      %1165 = vset.pattern.permute.xlu0 2
      %1166 = vperm.xlu0 %1165, %v586
      %v1167 = vpop.permute.xlu0 %1166
      %1169 = vset.pattern.permute.xlu0 2
      %1170 = vperm.xlu0 %1169, %v587
      %v1171 = vpop.permute.xlu0 %1170
      %1173 = vset.pattern.permute.xlu0 2
      %1174 = vperm.xlu0 %1173, %v588
      %v1175 = vpop.permute.xlu0 %1174
      %1177 = vset.pattern.permute.xlu0 2
      %1178 = vperm.xlu0 %1177, %v589
      %v1179 = vpop.permute.xlu0 %1178
      %1181 = vset.pattern.permute.xlu0 2
      %1182 = vperm.xlu0 %1181, %v590
      %v1183 = vpop.permute.xlu0 %1182
      %1185 = vset.pattern.permute.xlu0 2
      %1186 = vperm.xlu0 %1185, %v591
      %v1187 = vpop.permute.xlu0 %1186
      %1189 = vset.pattern.permute.xlu0 2
      %1190 = vperm.xlu0 %1189, %v592
      %v1191 = vpop.permute.xlu0 %1190
      %1193 = vset.pattern.permute.xlu0 2
      %1194 = vperm.xlu0 %1193, %v593
      %v1195 = vpop.permute.xlu0 %1194
      %1197 = vset.pattern.permute.xlu0 2
      %1198 = vperm.xlu0 %1197, %v594
      %v1199 = vpop.permute.xlu0 %1198
      %1201 = vset.pattern.permute.xlu0 2
      %1202 = vperm.xlu0 %1201, %v595
      %v1203 = vpop.permute.xlu0 %1202
      %1205 = vset.pattern.permute.xlu0 2
      %1206 = vperm.xlu0 %1205, %v596
      %v1207 = vpop.permute.xlu0 %1206
      %1209 = vset.pattern.permute.xlu0 2
      %1210 = vperm.xlu0 %1209, %v597
      %v1211 = vpop.permute.xlu0 %1210
      %1213 = vset.pattern.permute.xlu0 2
      %1214 = vperm.xlu0 %1213, %v598
      %v1215 = vpop.permute.xlu0 %1214
      %1217 = vset.pattern.permute.xlu0 2
      %1218 = vperm.xlu0 %1217, %v599
      %v1219 = vpop.permute.xlu0 %1218
      %1221 = vset.pattern.permute.xlu0 2
      %1222 = vperm.xlu0 %1221, %v600
      %v1223 = vpop.permute.xlu0 %1222
      %1225 = vset.pattern.permute.xlu0 2
      %1226 = vperm.xlu0 %1225, %v601
      %v1227 = vpop.permute.xlu0 %1226
      %1229 = vset.pattern.permute.xlu0 2
      %1230 = vperm.xlu0 %1229, %v602
      %v1231 = vpop.permute.xlu0 %1230
      %1233 = vset.pattern.permute.xlu0 2
      %1234 = vperm.xlu0 %1233, %v603
      %v1235 = vpop.permute.xlu0 %1234
      %1237 = vset.pattern.permute.xlu0 2
      %1238 = vperm.xlu0 %1237, %v604
      %v1239 = vpop.permute.xlu0 %1238
      %1241 = vset.pattern.permute.xlu0 2
      %1242 = vperm.xlu0 %1241, %v605
      %v1243 = vpop.permute.xlu0 %1242
      %1245 = vset.pattern.permute.xlu0 2
      %1246 = vperm.xlu0 %1245, %v606
      %v1247 = vpop.permute.xlu0 %1246
      %1249 = vset.pattern.permute.xlu0 2
      %1250 = vperm.xlu0 %1249, %v607
      %v1251 = vpop.permute.xlu0 %1250
      %1253 = vset.pattern.permute.xlu0 2
      %1254 = vperm.xlu0 %1253, %v608
      %v1255 = vpop.permute.xlu0 %1254
      %1257 = vset.pattern.permute.xlu0 2
      %1258 = vperm.xlu0 %1257, %v609
      %v1259 = vpop.permute.xlu0 %1258
      %1261 = vset.pattern.permute.xlu0 2
      %1262 = vperm.xlu0 %1261, %v610
      %v1263 = vpop.permute.xlu0 %1262
      %v1265 = vperm.slane %v1136, 0
      %v1266 = vmul.f32 %v1139, %v1265
      %v1267 = vmul.f32 %v1143, %v1265
      %v1268 = vmul.f32 %v1147, %v1265
      %v1269 = vmul.f32 %v1151, %v1265
      %v1270 = vmul.f32 %v1155, %v1265
      %v1271 = vmul.f32 %v1159, %v1265
      %v1272 = vmul.f32 %v1163, %v1265
      %v1273 = vmul.f32 %v1167, %v1265
      %v1274 = vmul.f32 %v1171, %v1265
      %v1275 = vmul.f32 %v1175, %v1265
      %v1276 = vmul.f32 %v1179, %v1265
      %v1277 = vmul.f32 %v1183, %v1265
      %v1278 = vmul.f32 %v1187, %v1265
      %v1279 = vmul.f32 %v1191, %v1265
      %v1280 = vmul.f32 %v1195, %v1265
      %v1281 = vmul.f32 %v1199, %v1265
      %v1282 = vmul.f32 %v1203, %v1265
      %v1283 = vmul.f32 %v1207, %v1265
      %v1284 = vmul.f32 %v1211, %v1265
      %v1285 = vmul.f32 %v1215, %v1265
      %v1286 = vmul.f32 %v1219, %v1265
      %v1287 = vmul.f32 %v1223, %v1265
      %v1288 = vmul.f32 %v1227, %v1265
      %v1289 = vmul.f32 %v1231, %v1265
      %v1290 = vmul.f32 %v1235, %v1265
      %v1291 = vmul.f32 %v1239, %v1265
      %v1292 = vmul.f32 %v1243, %v1265
      %v1293 = vmul.f32 %v1247, %v1265
      %v1294 = vmul.f32 %v1251, %v1265
      %v1295 = vmul.f32 %v1255, %v1265
      %v1296 = vmul.f32 %v1259, %v1265
      %v1297 = vmul.f32 %v1263, %v1265
      %v1298 = vadd.f32 %v1104, %v1266
      %v1299 = vadd.f32 %v1105, %v1267
      %v1300 = vadd.f32 %v1106, %v1268
      %v1301 = vadd.f32 %v1107, %v1269
      %v1302 = vadd.f32 %v1108, %v1270
      %v1303 = vadd.f32 %v1109, %v1271
      %v1304 = vadd.f32 %v1110, %v1272
      %v1305 = vadd.f32 %v1111, %v1273
      %v1306 = vadd.f32 %v1112, %v1274
      %v1307 = vadd.f32 %v1113, %v1275
      %v1308 = vadd.f32 %v1114, %v1276
      %v1309 = vadd.f32 %v1115, %v1277
      %v1310 = vadd.f32 %v1116, %v1278
      %v1311 = vadd.f32 %v1117, %v1279
      %v1312 = vadd.f32 %v1118, %v1280
      %v1313 = vadd.f32 %v1119, %v1281
      %v1314 = vadd.f32 %v1120, %v1282
      %v1315 = vadd.f32 %v1121, %v1283
      %v1316 = vadd.f32 %v1122, %v1284
      %v1317 = vadd.f32 %v1123, %v1285
      %v1318 = vadd.f32 %v1124, %v1286
      %v1319 = vadd.f32 %v1125, %v1287
      %v1320 = vadd.f32 %v1126, %v1288
      %v1321 = vadd.f32 %v1127, %v1289
      %v1322 = vadd.f32 %v1128, %v1290
      %v1323 = vadd.f32 %v1129, %v1291
      %v1324 = vadd.f32 %v1130, %v1292
      %v1325 = vadd.f32 %v1131, %v1293
      %v1326 = vadd.f32 %v1132, %v1294
      %v1327 = vadd.f32 %v1133, %v1295
      %v1328 = vadd.f32 %v1134, %v1296
      %v1329 = vadd.f32 %v1135, %v1297
      %v1330 = vld [vmem:[%s4 + $0x7] sm:$0x1]
      %1331 = vset.pattern.permute.xlu0 3
      %1332 = vperm.xlu0 %1331, %v579
      %v1333 = vpop.permute.xlu0 %1332
      %1335 = vset.pattern.permute.xlu0 3
      %1336 = vperm.xlu0 %1335, %v580
      %v1337 = vpop.permute.xlu0 %1336
      %1339 = vset.pattern.permute.xlu0 3
      %1340 = vperm.xlu0 %1339, %v581
      %v1341 = vpop.permute.xlu0 %1340
      %1343 = vset.pattern.permute.xlu0 3
      %1344 = vperm.xlu0 %1343, %v582
      %v1345 = vpop.permute.xlu0 %1344
      %1347 = vset.pattern.permute.xlu0 3
      %1348 = vperm.xlu0 %1347, %v583
      %v1349 = vpop.permute.xlu0 %1348
      %1351 = vset.pattern.permute.xlu0 3
      %1352 = vperm.xlu0 %1351, %v584
      %v1353 = vpop.permute.xlu0 %1352
      %1355 = vset.pattern.permute.xlu0 3
      %1356 = vperm.xlu0 %1355, %v585
      %v1357 = vpop.permute.xlu0 %1356
      %1359 = vset.pattern.permute.xlu0 3
      %1360 = vperm.xlu0 %1359, %v586
      %v1361 = vpop.permute.xlu0 %1360
      %1363 = vset.pattern.permute.xlu0 3
      %1364 = vperm.xlu0 %1363, %v587
      %v1365 = vpop.permute.xlu0 %1364
      %1367 = vset.pattern.permute.xlu0 3
      %1368 = vperm.xlu0 %1367, %v588
      %v1369 = vpop.permute.xlu0 %1368
      %1371 = vset.pattern.permute.xlu0 3
      %1372 = vperm.xlu0 %1371, %v589
      %v1373 = vpop.permute.xlu0 %1372
      %1375 = vset.pattern.permute.xlu0 3
      %1376 = vperm.xlu0 %1375, %v590
      %v1377 = vpop.permute.xlu0 %1376
      %1379 = vset.pattern.permute.xlu0 3
      %1380 = vperm.xlu0 %1379, %v591
      %v1381 = vpop.permute.xlu0 %1380
      %1383 = vset.pattern.permute.xlu0 3
      %1384 = vperm.xlu0 %1383, %v592
      %v1385 = vpop.permute.xlu0 %1384
      %1387 = vset.pattern.permute.xlu0 3
      %1388 = vperm.xlu0 %1387, %v593
      %v1389 = vpop.permute.xlu0 %1388
      %1391 = vset.pattern.permute.xlu0 3
      %1392 = vperm.xlu0 %1391, %v594
      %v1393 = vpop.permute.xlu0 %1392
      %1395 = vset.pattern.permute.xlu0 3
      %1396 = vperm.xlu0 %1395, %v595
      %v1397 = vpop.permute.xlu0 %1396
      %1399 = vset.pattern.permute.xlu0 3
      %1400 = vperm.xlu0 %1399, %v596
      %v1401 = vpop.permute.xlu0 %1400
      %1403 = vset.pattern.permute.xlu0 3
      %1404 = vperm.xlu0 %1403, %v597
      %v1405 = vpop.permute.xlu0 %1404
      %1407 = vset.pattern.permute.xlu0 3
      %1408 = vperm.xlu0 %1407, %v598
      %v1409 = vpop.permute.xlu0 %1408
      %1411 = vset.pattern.permute.xlu0 3
      %1412 = vperm.xlu0 %1411, %v599
      %v1413 = vpop.permute.xlu0 %1412
      %1415 = vset.pattern.permute.xlu0 3
      %1416 = vperm.xlu0 %1415, %v600
      %v1417 = vpop.permute.xlu0 %1416
      %1419 = vset.pattern.permute.xlu0 3
      %1420 = vperm.xlu0 %1419, %v601
      %v1421 = vpop.permute.xlu0 %1420
      %1423 = vset.pattern.permute.xlu0 3
      %1424 = vperm.xlu0 %1423, %v602
      %v1425 = vpop.permute.xlu0 %1424
      %1427 = vset.pattern.permute.xlu0 3
      %1428 = vperm.xlu0 %1427, %v603
      %v1429 = vpop.permute.xlu0 %1428
      %1431 = vset.pattern.permute.xlu0 3
      %1432 = vperm.xlu0 %1431, %v604
      %v1433 = vpop.permute.xlu0 %1432
      %1435 = vset.pattern.permute.xlu0 3
      %1436 = vperm.xlu0 %1435, %v605
      %v1437 = vpop.permute.xlu0 %1436
      %1439 = vset.pattern.permute.xlu0 3
      %1440 = vperm.xlu0 %1439, %v606
      %v1441 = vpop.permute.xlu0 %1440
      %1443 = vset.pattern.permute.xlu0 3
      %1444 = vperm.xlu0 %1443, %v607
      %v1445 = vpop.permute.xlu0 %1444
      %1447 = vset.pattern.permute.xlu0 3
      %1448 = vperm.xlu0 %1447, %v608
      %v1449 = vpop.permute.xlu0 %1448
      %1451 = vset.pattern.permute.xlu0 3
      %1452 = vperm.xlu0 %1451, %v609
      %v1453 = vpop.permute.xlu0 %1452
      %1455 = vset.pattern.permute.xlu0 3
      %1456 = vperm.xlu0 %1455, %v610
      %v1457 = vpop.permute.xlu0 %1456
      %v1459 = vperm.slane %v1330, 0
      %v1460 = vmul.f32 %v1333, %v1459
      %v1461 = vmul.f32 %v1337, %v1459
      %v1462 = vmul.f32 %v1341, %v1459
      %v1463 = vmul.f32 %v1345, %v1459
      %v1464 = vmul.f32 %v1349, %v1459
      %v1465 = vmul.f32 %v1353, %v1459
      %v1466 = vmul.f32 %v1357, %v1459
      %v1467 = vmul.f32 %v1361, %v1459
      %v1468 = vmul.f32 %v1365, %v1459
      %v1469 = vmul.f32 %v1369, %v1459
      %v1470 = vmul.f32 %v1373, %v1459
      %v1471 = vmul.f32 %v1377, %v1459
      %v1472 = vmul.f32 %v1381, %v1459
      %v1473 = vmul.f32 %v1385, %v1459
      %v1474 = vmul.f32 %v1389, %v1459
      %v1475 = vmul.f32 %v1393, %v1459
      %v1476 = vmul.f32 %v1397, %v1459
      %v1477 = vmul.f32 %v1401, %v1459
      %v1478 = vmul.f32 %v1405, %v1459
      %v1479 = vmul.f32 %v1409, %v1459
      %v1480 = vmul.f32 %v1413, %v1459
      %v1481 = vmul.f32 %v1417, %v1459
      %v1482 = vmul.f32 %v1421, %v1459
      %v1483 = vmul.f32 %v1425, %v1459
      %v1484 = vmul.f32 %v1429, %v1459
      %v1485 = vmul.f32 %v1433, %v1459
      %v1486 = vmul.f32 %v1437, %v1459
      %v1487 = vmul.f32 %v1441, %v1459
      %v1488 = vmul.f32 %v1445, %v1459
      %v1489 = vmul.f32 %v1449, %v1459
      %v1490 = vmul.f32 %v1453, %v1459
      %v1491 = vmul.f32 %v1457, %v1459
      %v1492 = vadd.f32 %v1298, %v1460
      %v1493 = vadd.f32 %v1299, %v1461
      %v1494 = vadd.f32 %v1300, %v1462
      %v1495 = vadd.f32 %v1301, %v1463
      %v1496 = vadd.f32 %v1302, %v1464
      %v1497 = vadd.f32 %v1303, %v1465
      %v1498 = vadd.f32 %v1304, %v1466
      %v1499 = vadd.f32 %v1305, %v1467
      %v1500 = vadd.f32 %v1306, %v1468
      %v1501 = vadd.f32 %v1307, %v1469
      %v1502 = vadd.f32 %v1308, %v1470
      %v1503 = vadd.f32 %v1309, %v1471
      %v1504 = vadd.f32 %v1310, %v1472
      %v1505 = vadd.f32 %v1311, %v1473
      %v1506 = vadd.f32 %v1312, %v1474
      %v1507 = vadd.f32 %v1313, %v1475
      %v1508 = vadd.f32 %v1314, %v1476
      %v1509 = vadd.f32 %v1315, %v1477
      %v1510 = vadd.f32 %v1316, %v1478
      %v1511 = vadd.f32 %v1317, %v1479
      %v1512 = vadd.f32 %v1318, %v1480
      %v1513 = vadd.f32 %v1319, %v1481
      %v1514 = vadd.f32 %v1320, %v1482
      %v1515 = vadd.f32 %v1321, %v1483
      %v1516 = vadd.f32 %v1322, %v1484
      %v1517 = vadd.f32 %v1323, %v1485
      %v1518 = vadd.f32 %v1324, %v1486
      %v1519 = vadd.f32 %v1325, %v1487
      %v1520 = vadd.f32 %v1326, %v1488
      %v1521 = vadd.f32 %v1327, %v1489
      %v1522 = vadd.f32 %v1328, %v1490
      %v1523 = vadd.f32 %v1329, %v1491
      %v1524 = vld [vmem:[%s4 + $0x1] sm:$0x1]
      %v1525 = vperm.slane %v1524, 0
      %v1526 = vadd.f32 %v1492, %v1525
      %v1527 = vadd.f32 %v1493, %v1525
      %v1528 = vadd.f32 %v1494, %v1525
      %v1529 = vadd.f32 %v1495, %v1525
      %v1530 = vadd.f32 %v1496, %v1525
      %v1531 = vadd.f32 %v1497, %v1525
      %v1532 = vadd.f32 %v1498, %v1525
      %v1533 = vadd.f32 %v1499, %v1525
      %v1534 = vadd.f32 %v1500, %v1525
      %v1535 = vadd.f32 %v1501, %v1525
      %v1536 = vadd.f32 %v1502, %v1525
      %v1537 = vadd.f32 %v1503, %v1525
      %v1538 = vadd.f32 %v1504, %v1525
      %v1539 = vadd.f32 %v1505, %v1525
      %v1540 = vadd.f32 %v1506, %v1525
      %v1541 = vadd.f32 %v1507, %v1525
      %v1542 = vadd.f32 %v1508, %v1525
      %v1543 = vadd.f32 %v1509, %v1525
      %v1544 = vadd.f32 %v1510, %v1525
      %v1545 = vadd.f32 %v1511, %v1525
      %v1546 = vadd.f32 %v1512, %v1525
      %v1547 = vadd.f32 %v1513, %v1525
      %v1548 = vadd.f32 %v1514, %v1525
      %v1549 = vadd.f32 %v1515, %v1525
      %v1550 = vadd.f32 %v1516, %v1525
      %v1551 = vadd.f32 %v1517, %v1525
      %v1552 = vadd.f32 %v1518, %v1525
      %v1553 = vadd.f32 %v1519, %v1525
      %v1554 = vadd.f32 %v1520, %v1525
      %v1555 = vadd.f32 %v1521, %v1525
      %v1556 = vadd.f32 %v1522, %v1525
      %v1557 = vadd.f32 %v1523, %v1525
      %v1558 = vmax.f32 %v1526, 0.0
      %v1559 = vmax.f32 %v1527, 0.0
      %v1560 = vmax.f32 %v1528, 0.0
      %v1561 = vmax.f32 %v1529, 0.0
      %v1562 = vmax.f32 %v1530, 0.0
      %v1563 = vmax.f32 %v1531, 0.0
      %v1564 = vmax.f32 %v1532, 0.0
      %v1565 = vmax.f32 %v1533, 0.0
      %v1566 = vmax.f32 %v1534, 0.0
      %v1567 = vmax.f32 %v1535, 0.0
      %v1568 = vmax.f32 %v1536, 0.0
      %v1569 = vmax.f32 %v1537, 0.0
      %v1570 = vmax.f32 %v1538, 0.0
      %v1571 = vmax.f32 %v1539, 0.0
      %v1572 = vmax.f32 %v1540, 0.0
      %v1573 = vmax.f32 %v1541, 0.0
      %v1574 = vmax.f32 %v1542, 0.0
      %v1575 = vmax.f32 %v1543, 0.0
      %v1576 = vmax.f32 %v1544, 0.0
      %v1577 = vmax.f32 %v1545, 0.0
      %v1578 = vmax.f32 %v1546, 0.0
      %v1579 = vmax.f32 %v1547, 0.0
      %v1580 = vmax.f32 %v1548, 0.0
      %v1581 = vmax.f32 %v1549, 0.0
      %v1582 = vmax.f32 %v1550, 0.0
      %v1583 = vmax.f32 %v1551, 0.0
      %v1584 = vmax.f32 %v1552, 0.0
      %v1585 = vmax.f32 %v1553, 0.0
      %v1586 = vmax.f32 %v1554, 0.0
      %v1587 = vmax.f32 %v1555, 0.0
      %v1588 = vmax.f32 %v1556, 0.0
      %v1589 = vmax.f32 %v1557, 0.0
      %v1590 = vld [vmem:[%s4 + $0x2] sm:$0x1]
      %v1591 = vperm.slane %v1590, 0
      %v1592 = vmul.f32 %v1558, %v1591
      %v1593 = vmul.f32 %v1559, %v1591
      %v1594 = vmul.f32 %v1560, %v1591
      %v1595 = vmul.f32 %v1561, %v1591
      %v1596 = vmul.f32 %v1562, %v1591
      %v1597 = vmul.f32 %v1563, %v1591
      %v1598 = vmul.f32 %v1564, %v1591
      %v1599 = vmul.f32 %v1565, %v1591
      %v1600 = vmul.f32 %v1566, %v1591
      %v1601 = vmul.f32 %v1567, %v1591
      %v1602 = vmul.f32 %v1568, %v1591
      %v1603 = vmul.f32 %v1569, %v1591
      %v1604 = vmul.f32 %v1570, %v1591
      %v1605 = vmul.f32 %v1571, %v1591
      %v1606 = vmul.f32 %v1572, %v1591
      %v1607 = vmul.f32 %v1573, %v1591
      %v1608 = vmul.f32 %v1574, %v1591
      %v1609 = vmul.f32 %v1575, %v1591
      %v1610 = vmul.f32 %v1576, %v1591
      %v1611 = vmul.f32 %v1577, %v1591
      %v1612 = vmul.f32 %v1578, %v1591
      %v1613 = vmul.f32 %v1579, %v1591
      %v1614 = vmul.f32 %v1580, %v1591
      %v1615 = vmul.f32 %v1581, %v1591
      %v1616 = vmul.f32 %v1582, %v1591
      %v1617 = vmul.f32 %v1583, %v1591
      %v1618 = vmul.f32 %v1584, %v1591
      %v1619 = vmul.f32 %v1585, %v1591
      %v1620 = vmul.f32 %v1586, %v1591
      %v1621 = vmul.f32 %v1587, %v1591
      %v1622 = vmul.f32 %v1588, %v1591
      %v1623 = vmul.f32 %v1589, %v1591
      %1624 = vadd.xlane.f32.xlu0 %v1592
      %v1625 = vpop.xlane.xlu0 %1624
      %1626 = vadd.xlane.f32.xlu0 %v1593
      %v1627 = vpop.xlane.xlu0 %1626
      %1628 = vadd.xlane.f32.xlu0 %v1594
      %v1629 = vpop.xlane.xlu0 %1628
      %1630 = vadd.xlane.f32.xlu0 %v1595
      %v1631 = vpop.xlane.xlu0 %1630
      %1632 = vadd.xlane.f32.xlu0 %v1596
      %v1633 = vpop.xlane.xlu0 %1632
      %1634 = vadd.xlane.f32.xlu0 %v1597
      %v1635 = vpop.xlane.xlu0 %1634
      %1636 = vadd.xlane.f32.xlu0 %v1598
      %v1637 = vpop.xlane.xlu0 %1636
      %1638 = vadd.xlane.f32.xlu0 %v1599
      %v1639 = vpop.xlane.xlu0 %1638
      %1640 = vadd.xlane.f32.xlu0 %v1600
      %v1641 = vpop.xlane.xlu0 %1640
      %1642 = vadd.xlane.f32.xlu0 %v1601
      %v1643 = vpop.xlane.xlu0 %1642
      %1644 = vadd.xlane.f32.xlu0 %v1602
      %v1645 = vpop.xlane.xlu0 %1644
      %1646 = vadd.xlane.f32.xlu0 %v1603
      %v1647 = vpop.xlane.xlu0 %1646
      %1648 = vadd.xlane.f32.xlu0 %v1604
      %v1649 = vpop.xlane.xlu0 %1648
      %1650 = vadd.xlane.f32.xlu0 %v1605
      %v1651 = vpop.xlane.xlu0 %1650
      %1652 = vadd.xlane.f32.xlu0 %v1606
      %v1653 = vpop.xlane.xlu0 %1652
      %1654 = vadd.xlane.f32.xlu0 %v1607
      %v1655 = vpop.xlane.xlu0 %1654
      %1656 = vadd.xlane.f32.xlu0 %v1608
      %v1657 = vpop.xlane.xlu0 %1656
      %1658 = vadd.xlane.f32.xlu0 %v1609
      %v1659 = vpop.xlane.xlu0 %1658
      %1660 = vadd.xlane.f32.xlu0 %v1610
      %v1661 = vpop.xlane.xlu0 %1660
      %1662 = vadd.xlane.f32.xlu0 %v1611
      %v1663 = vpop.xlane.xlu0 %1662
      %1664 = vadd.xlane.f32.xlu0 %v1612
      %v1665 = vpop.xlane.xlu0 %1664
      %1666 = vadd.xlane.f32.xlu0 %v1613
      %v1667 = vpop.xlane.xlu0 %1666
      %1668 = vadd.xlane.f32.xlu0 %v1614
      %v1669 = vpop.xlane.xlu0 %1668
      %1670 = vadd.xlane.f32.xlu0 %v1615
      %v1671 = vpop.xlane.xlu0 %1670
      %1672 = vadd.xlane.f32.xlu0 %v1616
      %v1673 = vpop.xlane.xlu0 %1672
      %1674 = vadd.xlane.f32.xlu0 %v1617
      %v1675 = vpop.xlane.xlu0 %1674
      %1676 = vadd.xlane.f32.xlu0 %v1618
      %v1677 = vpop.xlane.xlu0 %1676
      %1678 = vadd.xlane.f32.xlu0 %v1619
      %v1679 = vpop.xlane.xlu0 %1678
      %1680 = vadd.xlane.f32.xlu0 %v1620
      %v1681 = vpop.xlane.xlu0 %1680
      %1682 = vadd.xlane.f32.xlu0 %v1621
      %v1683 = vpop.xlane.xlu0 %1682
      %1684 = vadd.xlane.f32.xlu0 %v1622
      %v1685 = vpop.xlane.xlu0 %1684
      %1686 = vadd.xlane.f32.xlu0 %v1623
      %v1687 = vpop.xlane.xlu0 %1686
      %v1688 = vld [vmem:[%s4 + $0x3] sm:$0x1]
      %v1689 = vperm.slane %v1688, 0
      %v1690 = vadd.f32 %v1625, %v1689
      %v1691 = vadd.f32 %v1627, %v1689
      %v1692 = vadd.f32 %v1629, %v1689
      %v1693 = vadd.f32 %v1631, %v1689
      %v1694 = vadd.f32 %v1633, %v1689
      %v1695 = vadd.f32 %v1635, %v1689
      %v1696 = vadd.f32 %v1637, %v1689
      %v1697 = vadd.f32 %v1639, %v1689
      %v1698 = vadd.f32 %v1641, %v1689
      %v1699 = vadd.f32 %v1643, %v1689
      %v1700 = vadd.f32 %v1645, %v1689
      %v1701 = vadd.f32 %v1647, %v1689
      %v1702 = vadd.f32 %v1649, %v1689
      %v1703 = vadd.f32 %v1651, %v1689
      %v1704 = vadd.f32 %v1653, %v1689
      %v1705 = vadd.f32 %v1655, %v1689
      %v1706 = vadd.f32 %v1657, %v1689
      %v1707 = vadd.f32 %v1659, %v1689
      %v1708 = vadd.f32 %v1661, %v1689
      %v1709 = vadd.f32 %v1663, %v1689
      %v1710 = vadd.f32 %v1665, %v1689
      %v1711 = vadd.f32 %v1667, %v1689
      %v1712 = vadd.f32 %v1669, %v1689
      %v1713 = vadd.f32 %v1671, %v1689
      %v1714 = vadd.f32 %v1673, %v1689
      %v1715 = vadd.f32 %v1675, %v1689
      %v1716 = vadd.f32 %v1677, %v1689
      %v1717 = vadd.f32 %v1679, %v1689
      %v1718 = vadd.f32 %v1681, %v1689
      %v1719 = vadd.f32 %v1683, %v1689
      %v1720 = vadd.f32 %v1685, %v1689
      %v1721 = vadd.f32 %v1687, %v1689
      %vm1722 = vcmask 7168
      %1723 = vst.msk [vmem:[%s248] sm:$0xff] %vm1722, %v1690
      %1724 = vst.msk [vmem:[%s248 + $0x8] sm:$0xff] %vm1722, %v1691
      %1725 = vst.msk [vmem:[%s248 + $0x10] sm:$0xff] %vm1722, %v1692
      %1726 = vst.msk [vmem:[%s248 + $0x18] sm:$0xff] %vm1722, %v1693
      %1727 = vst.msk [vmem:[%s248 + $0x20] sm:$0xff] %vm1722, %v1694
      %1728 = vst.msk [vmem:[%s248 + $0x28] sm:$0xff] %vm1722, %v1695
      %1729 = vst.msk [vmem:[%s248 + $0x30] sm:$0xff] %vm1722, %v1696
      %1730 = vst.msk [vmem:[%s248 + $0x38] sm:$0xff] %vm1722, %v1697
      %1731 = vst.msk [vmem:[%s248 + $0x40] sm:$0xff] %vm1722, %v1698
      %1732 = vst.msk [vmem:[%s248 + $0x48] sm:$0xff] %vm1722, %v1699
      %1733 = vst.msk [vmem:[%s248 + $0x50] sm:$0xff] %vm1722, %v1700
      %1734 = vst.msk [vmem:[%s248 + $0x58] sm:$0xff] %vm1722, %v1701
      %1735 = vst.msk [vmem:[%s248 + $0x60] sm:$0xff] %vm1722, %v1702
      %1736 = vst.msk [vmem:[%s248 + $0x68] sm:$0xff] %vm1722, %v1703
      %1737 = vst.msk [vmem:[%s248 + $0x70] sm:$0xff] %vm1722, %v1704
      %1738 = vst.msk [vmem:[%s248 + $0x78] sm:$0xff] %vm1722, %v1705
      %1739 = vst.msk [vmem:[%s248 + $0x80] sm:$0xff] %vm1722, %v1706
      %1740 = vst.msk [vmem:[%s248 + $0x88] sm:$0xff] %vm1722, %v1707
      %1741 = vst.msk [vmem:[%s248 + $0x90] sm:$0xff] %vm1722, %v1708
      %1742 = vst.msk [vmem:[%s248 + $0x98] sm:$0xff] %vm1722, %v1709
      %1743 = vst.msk [vmem:[%s248 + $0xa0] sm:$0xff] %vm1722, %v1710
      %1744 = vst.msk [vmem:[%s248 + $0xa8] sm:$0xff] %vm1722, %v1711
      %1745 = vst.msk [vmem:[%s248 + $0xb0] sm:$0xff] %vm1722, %v1712
      %1746 = vst.msk [vmem:[%s248 + $0xb8] sm:$0xff] %vm1722, %v1713
      %1747 = vst.msk [vmem:[%s248 + $0xc0] sm:$0xff] %vm1722, %v1714
      %1748 = vst.msk [vmem:[%s248 + $0xc8] sm:$0xff] %vm1722, %v1715
      %1749 = vst.msk [vmem:[%s248 + $0xd0] sm:$0xff] %vm1722, %v1716
      %1750 = vst.msk [vmem:[%s248 + $0xd8] sm:$0xff] %vm1722, %v1717
      %1751 = vst.msk [vmem:[%s248 + $0xe0] sm:$0xff] %vm1722, %v1718
      %1752 = vst.msk [vmem:[%s248 + $0xe8] sm:$0xff] %vm1722, %v1719
      %1753 = vst.msk [vmem:[%s248 + $0xf0] sm:$0xff] %vm1722, %v1720
      %1754 = vst.msk [vmem:[%s248 + $0xf8] sm:$0xff] %vm1722, %v1721
      %s1755 = smul.u32 32, %s16
      %p1756 = scmp.lt.s32.totalorder %s1755, 63
      %s1757 = scalar_select %p1756, %s1755, 63
      %s1758 = smul.addr %s1757, 8
      %s1759 = scalar_lea.vmem %s5, %s1758
      // Predicated region
      $region41: #{critic_forward.1} parent=39 // pred_check
        %p1760 = pneg %p149
      $region42: #{critic_forward.1} parent=39 // pred_check_branch
        %1762 = sbr.rel (%p1760) target = $region44
      $region43: #{critic_forward.1} parent=39 // pred_region
        %s1763 = smul.u32 32, %s16
      $region44: #{critic_forward.1} parent=39 // pred_fallthru
        _
    $region40: #{critic_forward.1} parent=5 // pred_fallthru
      _
    %p1764 = scmp.le.s32.totalorder 2, %s11
    // Predicated region
    $region45: #{critic_forward.1} parent=5 // pred_check
      %p1765 = pneg %p1764
    $region46: #{critic_forward.1} parent=5 // pred_check_branch
      %1767 = sbr.rel (%p1765) target = $region48
    $region47: #{critic_forward.1} parent=5 // pred_region
      %s1768 = ssub.s32 %s11, 2
      // Predicated region
      $region49: #{critic_forward.1} parent=47 // pred_check
        %p1769 = pneg %p155
      $region50: #{critic_forward.1} parent=47 // pred_check_branch
        %1771 = sbr.rel (%p1769) target = $region52
      $region51: #{critic_forward.1} parent=47 // pred_region
        %s1772 = smul.u32 32, %s17
        %p1773 = scmp.lt.s32.totalorder %s1772, 63
        %s1774 = scalar_select %p1773, %s1772, 63
        %s1775 = smul.addr %s1774, 8
        %s1776 = scalar_lea.vmem %s5, %s1775
      $region52: #{critic_forward.1} parent=47 // pred_fallthru
        _
    $region48: #{critic_forward.1} parent=5 // pred_fallthru
      _
  $region6: #{critic_forward.1} parent=0 // loop_footer
    %s15 = sadd.s32 1, %s11
  $region7: #{critic_forward.1} parent=0 // loop_footer_branch
    %10 = sbr.rel target = $region3
  $region8: #{critic_forward.1} parent=0 // loop_exit
    _

</llo_original>
